<compile_context>
chip_gen: v6e
topology: v6e:2x2x1
jax: 0.10.0
libtpu: 0.0.40
codegen_flags: <defaults>
</compile_context>

<pallas_src>
import jax
import jax.numpy as jnp
import numpy as np
from jax.experimental import pallas as pl
from jax.experimental.pallas import tpu as pltpu

# ---- Module hyper-parameters (mirror the Conv.__init__ arguments) ----
CONV1D_1 = dict(in_channels=4, out_channels=8, kernel_size=3, padding=1)
CONV1D_2 = dict(in_channels=8, out_channels=8, kernel_size=3, padding=1)
MAXPOOL1D_1 = dict(kernel_size=2, stride=2)
MAXPOOL1D_2 = dict(kernel_size=2, stride=2)
HIDDEN_DIM = 32
X_DIM = 32
FC_1_SIZE = HIDDEN_DIM + X_DIM   # length of concat([hidden, x], dim=1)
FC_2_SIZE = HIDDEN_DIM


def get_conv_mp_out_size(in_size, last_layer, mps):
    size = in_size
    for mp in mps:
        size = round((size - mp['kernel_size']) / mp['stride'] + 1)
    size = size + 1 if size % 2 != 0 else size
    return int(size * last_layer['out_channels'])


# ----------------------------- Pallas kernel -----------------------------
#
# All activation operands are (rows, Bt) with rows = C*L stacked channel-major
# (row = c*L + l, exactly torch's row-major flatten order) and Bt samples on
# the lane axis.

def conv_head_kernel(xz_ref, xy_ref,
                     a1ze_ref, a1zo_ref, b1z_ref, a2ze_ref, a2zo_ref, b2z_ref,
                     wz_ref, bz_ref,
                     a1ye_ref, a1yo_ref, b1y_ref, a2ye_ref, a2yo_ref, b2y_ref,
                     wy_ref, by_ref,
                     out_ref):

    def head(x, a1e, a1o, b1, a2e, a2o, b2, wfc, bfc):
        # conv1 + maxpool1 fused:  pool(relu(conv1(x))) = relu(max(Ae@x, Ao@x) + b)
        h = jnp.maximum(
            jnp.dot(a1e, x, preferred_element_type=jnp.float32),
            jnp.dot(a1o, x, preferred_element_type=jnp.float32)) + b1
        h = jnp.maximum(h, 0.0)                      # ReLU (commutes with maxpool)
        # conv2 + maxpool2 fused (no ReLU after conv2 in the torch module)
        z = jnp.maximum(
            jnp.dot(a2e, h, preferred_element_type=jnp.float32),
            jnp.dot(a2o, h, preferred_element_type=jnp.float32)) + b2
        # Linear(. , 1) over the channel-major flattened features.
        return jnp.dot(wfc, z, preferred_element_type=jnp.float32) + bfc   # (1, Bt)

    rz = head(xz_ref[...], a1ze_ref[...], a1zo_ref[...], b1z_ref[...],
              a2ze_ref[...], a2zo_ref[...], b2z_ref[...], wz_ref[...], bz_ref[...])
    ry = head(xy_ref[...], a1ye_ref[...], a1yo_ref[...], b1y_ref[...],
              a2ye_ref[...], a2yo_ref[...], b2y_ref[...], wy_ref[...], by_ref[...])

    # TODO(synk): nn.Dropout(p=0.2) is identity at inference; training-mode
    # stochastic dropout is not implemented here.
    res = jax.nn.sigmoid(rz * ry)                                   # (1, Bt)
    # Lane-dense store: broadcast the result row over 8 sublanes (wrapper reads
    # row 0).  Avoids lane-width-1 masked partial stores.
    out_ref[...] = jnp.broadcast_to(res, out_ref.shape)


# ----------------------------- wrapper -----------------------------

def _conv_band_matrix(w, L):
    """Dense (C_out*L, C_in*L) matrix of Conv1d(kernel=3, stride=1, padding=1).

    M[co*L + l, ci*L + j] = w[co, ci, j - l + 1]  when |j - l| <= 1, else 0.
    """
    C_out, C_in, K = w.shape
    l = np.arange(L)[:, None]
    j = np.arange(L)[None, :]
    k = j - l + (K // 2)                     # tap index (K=3, padding=1)
    valid = (k >= 0) & (k < K)
    kc = np.clip(k, 0, K - 1)
    M = w[:, :, kc] * jnp.asarray(valid, w.dtype)        # (C_out, C_in, L, L)
    return jnp.transpose(M, (0, 2, 1, 3)).reshape(C_out * L, C_in * L)


def conv_forward(hidden, x, params):
    w1, b1, w2, b2, wfc1, bfc1, wfc2, bfc2 = params
    N, H = hidden.shape
    Xd = x.shape[1]
    C_in = CONV1D_1['in_channels']
    C1 = CONV1D_1['out_channels']
    C2 = CONV1D_2['out_channels']
    Lc = H + Xd
    assert N % C_in == 0
    B = N // C_in
    # TODO(synk): the kernel assumes Lc and H are multiples of 4 (two stride-2
    # pools); the odd-size "+1" branch of get_conv_mp_out_size is not replicated.
    assert Lc % 4 == 0 and H % 4 == 0

    # ---- batch tiling: batch on the lane axis, padded to a multiple of 128 ----
    Bt = 128 * max(1, min(4, -(-B // 128)))      # 128..512 samples per grid step
    B_pad = -(-B // Bt) * Bt
    n_tiles = B_pad // Bt

    f32 = jnp.float32

    # ---- activations: stacked channel-major rows, batch on lanes ----
    concat = jnp.concatenate([hidden, x], axis=1).astype(f32)            # (N, Lc)
    xz = concat.reshape(B, C_in, Lc).transpose(1, 2, 0).reshape(C_in * Lc, B)
    xy = hidden.astype(f32).reshape(B, C_in, H).transpose(1, 2, 0).reshape(C_in * H, B)
    xz = jnp.pad(xz, ((0, 0), (0, B_pad - B)))
    xy = jnp.pad(xy, ((0, 0), (0, B_pad - B)))

    # ---- constant operand matrices (built once per call, resident in VMEM) ----
    m1z = _conv_band_matrix(w1.astype(f32), Lc)        # (C1*Lc,   C_in*Lc)
    m2z = _conv_band_matrix(w2.astype(f32), Lc // 2)   # (C2*Lc/2, C1*Lc/2)
    m1y = _conv_band_matrix(w1.astype(f32), H)         # (C1*H,    C_in*H)
    m2y = _conv_band_matrix(w2.astype(f32), H // 2)    # (C2*H/2,  C1*H/2)
    # maxpool(2,2) fused in: even / odd output rows of each conv matrix.
    a1ze, a1zo = m1z[0::2], m1z[1::2]                  # (C1*Lc/2, C_in*Lc)
    a2ze, a2zo = m2z[0::2], m2z[1::2]                  # (C2*Lc/4, C1*Lc/2)
    a1ye, a1yo = m1y[0::2], m1y[1::2]
    a2ye, a2yo = m2y[0::2], m2y[1::2]
    # Per-channel biases expanded to the pooled row layout.
    b1z = jnp.repeat(b1.astype(f32), Lc // 2).reshape(-1, 1)
    b2z = jnp.repeat(b2.astype(f32), Lc // 4).reshape(-1, 1)
    b1y = jnp.repeat(b1.astype(f32), H // 2).reshape(-1, 1)
    b2y = jnp.repeat(b2.astype(f32), H // 4).reshape(-1, 1)
    Lz, Ly = Lc // 4, H // 4
    wz = wfc1.astype(f32).reshape(1, C2 * Lz)          # fc1.weight, (c, l)-major
    wy = wfc2.astype(f32).reshape(1, C2 * Ly)          # fc2.weight
    bz = bfc1.astype(f32).reshape(1, 1)
    by = bfc2.astype(f32).reshape(1, 1)

    def act_spec(rows):
        return pl.BlockSpec((rows, Bt), lambda i: (0, i))

    def const_spec(arr):
        return pl.BlockSpec(arr.shape, lambda i: (0, 0))

    out = pl.pallas_call(
        conv_head_kernel,
        out_shape=jax.ShapeDtypeStruct((8, B_pad), f32),
        grid_spec=pltpu.PrefetchScalarGridSpec(
            num_scalar_prefetch=0,
            grid=(n_tiles,),
            in_specs=[
                act_spec(C_in * Lc),                       # xz
                act_spec(C_in * H),                        # xy
                const_spec(a1ze), const_spec(a1zo), const_spec(b1z),
                const_spec(a2ze), const_spec(a2zo), const_spec(b2z),
                const_spec(wz), const_spec(bz),
                const_spec(a1ye), const_spec(a1yo), const_spec(b1y),
                const_spec(a2ye), const_spec(a2yo), const_spec(b2y),
                const_spec(wy), const_spec(by),
            ],
            out_specs=pl.BlockSpec((8, Bt), lambda i: (0, i)),
        ),
        compiler_params=pltpu.CompilerParams(
            dimension_semantics=("parallel",)),
    )(xz, xy,
      a1ze, a1zo, b1z, a2ze, a2zo, b2z, wz, bz,
      a1ye, a1yo, b1y, a2ye, a2yo, b2y, wy, by)

    return out[0, :B]


# ----------------------- pure-JAX reference (for checking) -----------------------

def _ref_conv1d(x, w, b, padding):
    out = jax.lax.conv_general_dilated(
        x, w, window_strides=(1,), padding=[(padding, padding)],
        dimension_numbers=('NCH', 'OIH', 'NCH'))
    return out + b[None, :, None]


def _ref_maxpool2(x):
    B, C, L = x.shape
    return jnp.max(x.reshape(B, C, L // 2, 2), axis=-1)


def conv_forward_ref(hidden, x, params):
    w1, b1, w2, b2, wfc1, bfc1, wfc2, bfc2 = params
    N, H = hidden.shape
    C_in = CONV1D_1['in_channels']
    Lc = H + x.shape[1]
    B = N // C_in
    concat = jnp.concatenate([hidden, x], axis=1).reshape(B, C_in, Lc)
    hid = hidden.reshape(B, C_in, H)

    def pipe(a):
        h = _ref_maxpool2(jax.nn.relu(_ref_conv1d(a, w1, b1, CONV1D_1['padding'])))
        h = _ref_maxpool2(_ref_conv1d(h, w2, b2, CONV1D_2['padding']))
        return h

    Z = pipe(concat).reshape(B, -1)
    Y = pipe(hid).reshape(B, -1)
    res = (Z @ wfc1.T + bfc1) * (Y @ wfc2.T + bfc2)   # dropout = identity (inference)
    return jax.nn.sigmoid(res.reshape(-1))


if __name__ == "__main__":
    key = jax.random.PRNGKey(0)
    keys = jax.random.split(key, 12)

    C_in = CONV1D_1['in_channels']
    C1 = CONV1D_1['out_channels']
    C2 = CONV1D_2['out_channels']
    K1 = CONV1D_1['kernel_size']
    K2 = CONV1D_2['kernel_size']
    fc1_size = get_conv_mp_out_size(FC_1_SIZE, CONV1D_2, [MAXPOOL1D_1, MAXPOOL1D_2])
    fc2_size = get_conv_mp_out_size(FC_2_SIZE, CONV1D_2, [MAXPOOL1D_1, MAXPOOL1D_2])

    # Deterministic synthetic parameters (shapes follow the nn.Module __init__).
    w1 = jax.random.normal(keys[0], (C1, C_in, K1), jnp.float32) * 0.2
    b1 = jax.random.normal(keys[1], (C1,), jnp.float32) * 0.1
    w2 = jax.random.normal(keys[2], (C2, C1, K2), jnp.float32) * 0.2
    b2 = jax.random.normal(keys[3], (C2,), jnp.float32) * 0.1
    wfc1 = jax.random.normal(keys[4], (1, fc1_size), jnp.float32) * 0.1
    bfc1 = jax.random.normal(keys[5], (1,), jnp.float32) * 0.1
    wfc2 = jax.random.normal(keys[6], (1, fc2_size), jnp.float32) * 0.1
    bfc2 = jax.random.normal(keys[7], (1,), jnp.float32) * 0.1
    params = (w1, b1, w2, b2, wfc1, bfc1, wfc2, bfc2)

    # --- small check (B=2 graphs, as in the spec example) ---
    B = 2
    N = B * C_in
    hidden = jax.random.normal(keys[8], (N, HIDDEN_DIM), jnp.float32)
    x = jax.random.normal(keys[9], (N, X_DIM), jnp.float32)

    out = jax.block_until_ready(conv_forward(hidden, x, params))
    ref = jax.block_until_ready(conv_forward_ref(hidden, x, params))
    assert out.shape == (B,)
    np.testing.assert_allclose(np.asarray(out), np.asarray(ref), rtol=1e-4, atol=1e-5)

    # --- larger batched check (multiple grid tiles + batch padding) ---
    B2 = 600
    N2 = B2 * C_in
    hidden2 = jax.random.normal(keys[10], (N2, HIDDEN_DIM), jnp.float32)
    x2 = jax.random.normal(keys[11], (N2, X_DIM), jnp.float32)

    out2 = jax.block_until_ready(conv_forward(hidden2, x2, params))
    ref2 = jax.block_until_ready(conv_forward_ref(hidden2, x2, params))
    assert out2.shape == (B2,)
    np.testing.assert_allclose(np.asarray(out2), np.asarray(ref2), rtol=1e-4, atol=1e-5)

    print("KERNEL_OK")
</pallas_src>

<mosaic_0001>
module attributes {stable_mosaic.version = 11 : i64} {
  func.func @conv_head_kernel(%arg0: i32, %arg1: memref<256x128xf32, #tpu.memory_space<vmem>>, %arg2: memref<128x128xf32, #tpu.memory_space<vmem>>, %arg3: memref<256x256xf32, #tpu.memory_space<vmem>>, %arg4: memref<256x256xf32, #tpu.memory_space<vmem>>, %arg5: memref<256x1xf32, #tpu.memory_space<vmem>>, %arg6: memref<128x256xf32, #tpu.memory_space<vmem>>, %arg7: memref<128x256xf32, #tpu.memory_space<vmem>>, %arg8: memref<128x1xf32, #tpu.memory_space<vmem>>, %arg9: memref<1x128xf32, #tpu.memory_space<vmem>>, %arg10: memref<1x1xf32, #tpu.memory_space<vmem>>, %arg11: memref<128x128xf32, #tpu.memory_space<vmem>>, %arg12: memref<128x128xf32, #tpu.memory_space<vmem>>, %arg13: memref<128x1xf32, #tpu.memory_space<vmem>>, %arg14: memref<64x128xf32, #tpu.memory_space<vmem>>, %arg15: memref<64x128xf32, #tpu.memory_space<vmem>>, %arg16: memref<64x1xf32, #tpu.memory_space<vmem>>, %arg17: memref<1x64xf32, #tpu.memory_space<vmem>>, %arg18: memref<1x1xf32, #tpu.memory_space<vmem>>, %arg19: memref<8x128xf32, #tpu.memory_space<vmem>>) attributes {dimension_semantics = [#tpu.dimension_semantics<parallel>], iteration_bounds = array<i64: 1>, scalar_prefetch = 0 : i64, scratch_operands = 0 : i64, tpu.core_type = #tpu.core_type<tc>, window_params = [{transform_indices = @transform_0, window_bounds = array<i64: 256, 128>}, {transform_indices = @transform_1, window_bounds = array<i64: 128, 128>}, {pipeline_mode = #tpu.pipeline_mode<synchronous>, transform_indices = @transform_2, window_bounds = array<i64: 256, 256>}, {pipeline_mode = #tpu.pipeline_mode<synchronous>, transform_indices = @transform_3, window_bounds = array<i64: 256, 256>}, {pipeline_mode = #tpu.pipeline_mode<synchronous>, transform_indices = @transform_4, window_bounds = array<i64: 256, 1>}, {pipeline_mode = #tpu.pipeline_mode<synchronous>, transform_indices = @transform_5, window_bounds = array<i64: 128, 256>}, {pipeline_mode = #tpu.pipeline_mode<synchronous>, transform_indices = @transform_6, window_bounds = array<i64: 128, 256>}, {pipeline_mode = #tpu.pipeline_mode<synchronous>, transform_indices = @transform_7, window_bounds = array<i64: 128, 1>}, {pipeline_mode = #tpu.pipeline_mode<synchronous>, transform_indices = @transform_8, window_bounds = array<i64: 1, 128>}, {pipeline_mode = #tpu.pipeline_mode<synchronous>, transform_indices = @transform_9, window_bounds = array<i64: 1, 1>}, {pipeline_mode = #tpu.pipeline_mode<synchronous>, transform_indices = @transform_10, window_bounds = array<i64: 128, 128>}, {pipeline_mode = #tpu.pipeline_mode<synchronous>, transform_indices = @transform_11, window_bounds = array<i64: 128, 128>}, {pipeline_mode = #tpu.pipeline_mode<synchronous>, transform_indices = @transform_12, window_bounds = array<i64: 128, 1>}, {pipeline_mode = #tpu.pipeline_mode<synchronous>, transform_indices = @transform_13, window_bounds = array<i64: 64, 128>}, {pipeline_mode = #tpu.pipeline_mode<synchronous>, transform_indices = @transform_14, window_bounds = array<i64: 64, 128>}, {pipeline_mode = #tpu.pipeline_mode<synchronous>, transform_indices = @transform_15, window_bounds = array<i64: 64, 1>}, {pipeline_mode = #tpu.pipeline_mode<synchronous>, transform_indices = @transform_16, window_bounds = array<i64: 1, 64>}, {pipeline_mode = #tpu.pipeline_mode<synchronous>, transform_indices = @transform_17, window_bounds = array<i64: 1, 1>}, {transform_indices = @transform_18, window_bounds = array<i64: 8, 128>}]} {
    %c0 = arith.constant 0 : index
    %c0_0 = arith.constant 0 : index
    %0 = vector.load %arg1[%c0, %c0_0] : memref<256x128xf32, #tpu.memory_space<vmem>>, vector<256x128xf32>
    %c0_1 = arith.constant 0 : index
    %c0_2 = arith.constant 0 : index
    %1 = vector.load %arg3[%c0_1, %c0_2] : memref<256x256xf32, #tpu.memory_space<vmem>>, vector<256x256xf32>
    %c0_3 = arith.constant 0 : index
    %c0_4 = arith.constant 0 : index
    %2 = vector.load %arg4[%c0_3, %c0_4] : memref<256x256xf32, #tpu.memory_space<vmem>>, vector<256x256xf32>
    %c0_5 = arith.constant 0 : index
    %c0_6 = arith.constant 0 : index
    %3 = vector.load %arg5[%c0_5, %c0_6] : memref<256x1xf32, #tpu.memory_space<vmem>>, vector<256x1xf32>
    %c0_7 = arith.constant 0 : index
    %c0_8 = arith.constant 0 : index
    %4 = vector.load %arg6[%c0_7, %c0_8] : memref<128x256xf32, #tpu.memory_space<vmem>>, vector<128x256xf32>
    %c0_9 = arith.constant 0 : index
    %c0_10 = arith.constant 0 : index
    %5 = vector.load %arg7[%c0_9, %c0_10] : memref<128x256xf32, #tpu.memory_space<vmem>>, vector<128x256xf32>
    %c0_11 = arith.constant 0 : index
    %c0_12 = arith.constant 0 : index
    %6 = vector.load %arg8[%c0_11, %c0_12] : memref<128x1xf32, #tpu.memory_space<vmem>>, vector<128x1xf32>
    %c0_13 = arith.constant 0 : index
    %c0_14 = arith.constant 0 : index
    %7 = vector.load %arg9[%c0_13, %c0_14] : memref<1x128xf32, #tpu.memory_space<vmem>>, vector<1x128xf32>
    %c0_15 = arith.constant 0 : index
    %c0_16 = arith.constant 0 : index
    %8 = vector.load %arg10[%c0_15, %c0_16] : memref<1x1xf32, #tpu.memory_space<vmem>>, vector<1x1xf32>
    %cst = arith.constant dense<0.000000e+00> : vector<256x128xf32>
    %9 = tpu.matmul %1, %0, %cst {dimension_numbers = #tpu.dot_dimension_numbers<[1], [0], [0], [1], [0, 0, 1, 1], [], []>} : vector<256x256xf32>, vector<256x128xf32>, vector<256x128xf32> -> vector<256x128xf32>
    %cst_17 = arith.constant dense<0.000000e+00> : vector<256x128xf32>
    %10 = tpu.matmul %2, %0, %cst_17 {dimension_numbers = #tpu.dot_dimension_numbers<[1], [0], [0], [1], [0, 0, 1, 1], [], []>} : vector<256x256xf32>, vector<256x128xf32>, vector<256x128xf32> -> vector<256x128xf32>
    %11 = arith.maximumf %9, %10 : vector<256x128xf32>
    %12 = vector.broadcast %3 : vector<256x1xf32> to vector<256x128xf32>
    %13 = arith.addf %11, %12 : vector<256x128xf32>
    %cst_18 = arith.constant 0.000000e+00 : f32
    %14 = vector.broadcast %cst_18 : f32 to vector<256x128xf32>
    %15 = arith.maximumf %13, %14 : vector<256x128xf32>
    %cst_19 = arith.constant dense<0.000000e+00> : vector<128x128xf32>
    %16 = tpu.matmul %4, %15, %cst_19 {dimension_numbers = #tpu.dot_dimension_numbers<[1], [0], [0], [1], [0, 0, 1, 1], [], []>} : vector<128x256xf32>, vector<256x128xf32>, vector<128x128xf32> -> vector<128x128xf32>
    %cst_20 = arith.constant dense<0.000000e+00> : vector<128x128xf32>
    %17 = tpu.matmul %5, %15, %cst_20 {dimension_numbers = #tpu.dot_dimension_numbers<[1], [0], [0], [1], [0, 0, 1, 1], [], []>} : vector<128x256xf32>, vector<256x128xf32>, vector<128x128xf32> -> vector<128x128xf32>
    %18 = arith.maximumf %16, %17 : vector<128x128xf32>
    %19 = vector.broadcast %6 : vector<128x1xf32> to vector<128x128xf32>
    %20 = arith.addf %18, %19 : vector<128x128xf32>
    %cst_21 = arith.constant dense<0.000000e+00> : vector<1x128xf32>
    %21 = tpu.matmul %7, %20, %cst_21 {dimension_numbers = #tpu.dot_dimension_numbers<[1], [0], [0], [1], [0, 0, 1, 1], [], []>} : vector<1x128xf32>, vector<128x128xf32>, vector<1x128xf32> -> vector<1x128xf32>
    %22 = vector.broadcast %8 : vector<1x1xf32> to vector<1x128xf32>
    %23 = arith.addf %21, %22 : vector<1x128xf32>
    %c0_22 = arith.constant 0 : index
    %c0_23 = arith.constant 0 : index
    %24 = vector.load %arg2[%c0_22, %c0_23] : memref<128x128xf32, #tpu.memory_space<vmem>>, vector<128x128xf32>
    %c0_24 = arith.constant 0 : index
    %c0_25 = arith.constant 0 : index
    %25 = vector.load %arg11[%c0_24, %c0_25] : memref<128x128xf32, #tpu.memory_space<vmem>>, vector<128x128xf32>
    %c0_26 = arith.constant 0 : index
    %c0_27 = arith.constant 0 : index
    %26 = vector.load %arg12[%c0_26, %c0_27] : memref<128x128xf32, #tpu.memory_space<vmem>>, vector<128x128xf32>
    %c0_28 = arith.constant 0 : index
    %c0_29 = arith.constant 0 : index
    %27 = vector.load %arg13[%c0_28, %c0_29] : memref<128x1xf32, #tpu.memory_space<vmem>>, vector<128x1xf32>
    %c0_30 = arith.constant 0 : index
    %c0_31 = arith.constant 0 : index
    %28 = vector.load %arg14[%c0_30, %c0_31] : memref<64x128xf32, #tpu.memory_space<vmem>>, vector<64x128xf32>
    %c0_32 = arith.constant 0 : index
    %c0_33 = arith.constant 0 : index
    %29 = vector.load %arg15[%c0_32, %c0_33] : memref<64x128xf32, #tpu.memory_space<vmem>>, vector<64x128xf32>
    %c0_34 = arith.constant 0 : index
    %c0_35 = arith.constant 0 : index
    %30 = vector.load %arg16[%c0_34, %c0_35] : memref<64x1xf32, #tpu.memory_space<vmem>>, vector<64x1xf32>
    %c0_36 = arith.constant 0 : index
    %c0_37 = arith.constant 0 : index
    %31 = vector.load %arg17[%c0_36, %c0_37] : memref<1x64xf32, #tpu.memory_space<vmem>>, vector<1x64xf32>
    %c0_38 = arith.constant 0 : index
    %c0_39 = arith.constant 0 : index
    %32 = vector.load %arg18[%c0_38, %c0_39] : memref<1x1xf32, #tpu.memory_space<vmem>>, vector<1x1xf32>
    %cst_40 = arith.constant dense<0.000000e+00> : vector<128x128xf32>
    %33 = tpu.matmul %25, %24, %cst_40 {dimension_numbers = #tpu.dot_dimension_numbers<[1], [0], [0], [1], [0, 0, 1, 1], [], []>} : vector<128x128xf32>, vector<128x128xf32>, vector<128x128xf32> -> vector<128x128xf32>
    %cst_41 = arith.constant dense<0.000000e+00> : vector<128x128xf32>
    %34 = tpu.matmul %26, %24, %cst_41 {dimension_numbers = #tpu.dot_dimension_numbers<[1], [0], [0], [1], [0, 0, 1, 1], [], []>} : vector<128x128xf32>, vector<128x128xf32>, vector<128x128xf32> -> vector<128x128xf32>
    %35 = arith.maximumf %33, %34 : vector<128x128xf32>
    %36 = vector.broadcast %27 : vector<128x1xf32> to vector<128x128xf32>
    %37 = arith.addf %35, %36 : vector<128x128xf32>
    %cst_42 = arith.constant 0.000000e+00 : f32
    %38 = vector.broadcast %cst_42 : f32 to vector<128x128xf32>
    %39 = arith.maximumf %37, %38 : vector<128x128xf32>
    %cst_43 = arith.constant dense<0.000000e+00> : vector<64x128xf32>
    %40 = tpu.matmul %28, %39, %cst_43 {dimension_numbers = #tpu.dot_dimension_numbers<[1], [0], [0], [1], [0, 0, 1, 1], [], []>} : vector<64x128xf32>, vector<128x128xf32>, vector<64x128xf32> -> vector<64x128xf32>
    %cst_44 = arith.constant dense<0.000000e+00> : vector<64x128xf32>
    %41 = tpu.matmul %29, %39, %cst_44 {dimension_numbers = #tpu.dot_dimension_numbers<[1], [0], [0], [1], [0, 0, 1, 1], [], []>} : vector<64x128xf32>, vector<128x128xf32>, vector<64x128xf32> -> vector<64x128xf32>
    %42 = arith.maximumf %40, %41 : vector<64x128xf32>
    %43 = vector.broadcast %30 : vector<64x1xf32> to vector<64x128xf32>
    %44 = arith.addf %42, %43 : vector<64x128xf32>
    %cst_45 = arith.constant dense<0.000000e+00> : vector<1x128xf32>
    %45 = tpu.matmul %31, %44, %cst_45 {dimension_numbers = #tpu.dot_dimension_numbers<[1], [0], [0], [1], [0, 0, 1, 1], [], []>} : vector<1x64xf32>, vector<64x128xf32>, vector<1x128xf32> -> vector<1x128xf32>
    %46 = vector.broadcast %32 : vector<1x1xf32> to vector<1x128xf32>
    %47 = arith.addf %45, %46 : vector<1x128xf32>
    %48 = arith.mulf %23, %47 : vector<1x128xf32>
    %49 = arith.negf %48 : vector<1x128xf32>
    %50 = math.exp %49 : vector<1x128xf32>
    %cst_46 = arith.constant 1.000000e+00 : f32
    %51 = vector.broadcast %cst_46 : f32 to vector<1x128xf32>
    %52 = arith.addf %51, %50 : vector<1x128xf32>
    %53 = arith.divf %51, %52 : vector<1x128xf32>
    %54 = vector.shape_cast %53 : vector<1x128xf32> to vector<1x128xf32>
    %55 = vector.broadcast %54 : vector<1x128xf32> to vector<8x128xf32>
    %c0_47 = arith.constant 0 : index
    %c0_48 = arith.constant 0 : index
    %56 = vector.load %arg19[%c0_47, %c0_48] : memref<8x128xf32, #tpu.memory_space<vmem>>, vector<8x128xf32>
    tpu.vector_store %arg19[%c0_47, %c0_48], %55 {strides = array<i32>} : memref<8x128xf32, #tpu.memory_space<vmem>>, vector<8x128xf32>,
    return
  }
  func.func @transform_0(%arg0: i32) -> (i32, i32) {
    %c0_i32 = arith.constant 0 : i32
    %c0_i32_0 = arith.constant 0 : i32
    return %c0_i32, %arg0 : i32, i32
  }
  func.func @transform_1(%arg0: i32) -> (i32, i32) {
    %c0_i32 = arith.constant 0 : i32
    %c0_i32_0 = arith.constant 0 : i32
    return %c0_i32, %arg0 : i32, i32
  }
  func.func @transform_2(%arg0: i32) -> (i32, i32) {
    %c0_i32 = arith.constant 0 : i32
    %c0_i32_0 = arith.constant 0 : i32
    %c0_i32_1 = arith.constant 0 : i32
    return %c0_i32, %c0_i32_0 : i32, i32
  }
  func.func @transform_3(%arg0: i32) -> (i32, i32) {
    %c0_i32 = arith.constant 0 : i32
    %c0_i32_0 = arith.constant 0 : i32
    %c0_i32_1 = arith.constant 0 : i32
    return %c0_i32, %c0_i32_0 : i32, i32
  }
  func.func @transform_4(%arg0: i32) -> (i32, i32) {
    %c0_i32 = arith.constant 0 : i32
    %c0_i32_0 = arith.constant 0 : i32
    %c0_i32_1 = arith.constant 0 : i32
    return %c0_i32, %c0_i32_0 : i32, i32
  }
  func.func @transform_5(%arg0: i32) -> (i32, i32) {
    %c0_i32 = arith.constant 0 : i32
    %c0_i32_0 = arith.constant 0 : i32
    %c0_i32_1 = arith.constant 0 : i32
    return %c0_i32, %c0_i32_0 : i32, i32
  }
  func.func @transform_6(%arg0: i32) -> (i32, i32) {
    %c0_i32 = arith.constant 0 : i32
    %c0_i32_0 = arith.constant 0 : i32
    %c0_i32_1 = arith.constant 0 : i32
    return %c0_i32, %c0_i32_0 : i32, i32
  }
  func.func @transform_7(%arg0: i32) -> (i32, i32) {
    %c0_i32 = arith.constant 0 : i32
    %c0_i32_0 = arith.constant 0 : i32
    %c0_i32_1 = arith.constant 0 : i32
    return %c0_i32, %c0_i32_0 : i32, i32
  }
  func.func @transform_8(%arg0: i32) -> (i32, i32) {
    %c0_i32 = arith.constant 0 : i32
    %c0_i32_0 = arith.constant 0 : i32
    %c0_i32_1 = arith.constant 0 : i32
    return %c0_i32, %c0_i32_0 : i32, i32
  }
  func.func @transform_9(%arg0: i32) -> (i32, i32) {
    %c0_i32 = arith.constant 0 : i32
    %c0_i32_0 = arith.constant 0 : i32
    %c0_i32_1 = arith.constant 0 : i32
    return %c0_i32, %c0_i32_0 : i32, i32
  }
  func.func @transform_10(%arg0: i32) -> (i32, i32) {
    %c0_i32 = arith.constant 0 : i32
    %c0_i32_0 = arith.constant 0 : i32
    %c0_i32_1 = arith.constant 0 : i32
    return %c0_i32, %c0_i32_0 : i32, i32
  }
  func.func @transform_11(%arg0: i32) -> (i32, i32) {
    %c0_i32 = arith.constant 0 : i32
    %c0_i32_0 = arith.constant 0 : i32
    %c0_i32_1 = arith.constant 0 : i32
    return %c0_i32, %c0_i32_0 : i32, i32
  }
  func.func @transform_12(%arg0: i32) -> (i32, i32) {
    %c0_i32 = arith.constant 0 : i32
    %c0_i32_0 = arith.constant 0 : i32
    %c0_i32_1 = arith.constant 0 : i32
    return %c0_i32, %c0_i32_0 : i32, i32
  }
  func.func @transform_13(%arg0: i32) -> (i32, i32) {
    %c0_i32 = arith.constant 0 : i32
    %c0_i32_0 = arith.constant 0 : i32
    %c0_i32_1 = arith.constant 0 : i32
    return %c0_i32, %c0_i32_0 : i32, i32
  }
  func.func @transform_14(%arg0: i32) -> (i32, i32) {
    %c0_i32 = arith.constant 0 : i32
    %c0_i32_0 = arith.constant 0 : i32
    %c0_i32_1 = arith.constant 0 : i32
    return %c0_i32, %c0_i32_0 : i32, i32
  }
  func.func @transform_15(%arg0: i32) -> (i32, i32) {
    %c0_i32 = arith.constant 0 : i32
    %c0_i32_0 = arith.constant 0 : i32
    %c0_i32_1 = arith.constant 0 : i32
    return %c0_i32, %c0_i32_0 : i32, i32
  }
  func.func @transform_16(%arg0: i32) -> (i32, i32) {
    %c0_i32 = arith.constant 0 : i32
    %c0_i32_0 = arith.constant 0 : i32
    %c0_i32_1 = arith.constant 0 : i32
    return %c0_i32, %c0_i32_0 : i32, i32
  }
  func.func @transform_17(%arg0: i32) -> (i32, i32) {
    %c0_i32 = arith.constant 0 : i32
    %c0_i32_0 = arith.constant 0 : i32
    %c0_i32_1 = arith.constant 0 : i32
    return %c0_i32, %c0_i32_0 : i32, i32
  }
  func.func @transform_18(%arg0: i32) -> (i32, i32) {
    %c0_i32 = arith.constant 0 : i32
    %c0_i32_0 = arith.constant 0 : i32
    return %c0_i32, %arg0 : i32, i32
  }
}

</mosaic_0001>

<llo_original>
// kernel: tpu_custom_call.1
$region0: #{tpu_custom_call.1}
  #allocation0 [shape = 'u32[]', space=smem, size = 0x4, offset = 0x4, fixed_abs, tag = 'smem constant byte address 0x4 - core index']
  #allocation1 [shape = 'u32[144,128]{1,0:T(1,128)}', space=vmem, size = 0x12000, scoped, tag = 'internal scratch']
  #allocation2 [shape = 'f32[1,1]{1,0:T(1,128)S(1)}', space=vmem, size = 0x200, scoped, tag = 'scoped memory for tpu_custom_call.1']
  #allocation3 [shape = 'f32[1,1]{1,0:T(1,128)S(1)}', space=vmem, size = 0x200, scoped, tag = 'scoped memory for tpu_custom_call.1']
  %s0 = inlined_call_operand.hbm [shape: f32[256,128], index: 0, kind: input, shape index: {}]
  %s1 = inlined_call_operand.hbm [shape: f32[128,128], index: 1, kind: input, shape index: {}]
  %s2 = inlined_call_operand.vmem [shape: f32[256,256], index: 2, kind: input, shape index: {}]
  %s3 = inlined_call_operand.hbm [shape: f32[256,256], index: 3, kind: input, shape index: {}]
  %s4 = inlined_call_operand.vmem [shape: f32[256,1], index: 4, kind: input, shape index: {}]
  %s5 = inlined_call_operand.hbm [shape: f32[128,256], index: 5, kind: input, shape index: {}]
  %s6 = inlined_call_operand.hbm [shape: f32[128,256], index: 6, kind: input, shape index: {}]
  %s7 = inlined_call_operand.vmem [shape: f32[128,1], index: 7, kind: input, shape index: {}]
  %s8 = inlined_call_operand.vmem [shape: f32[1,128], index: 8, kind: input, shape index: {}]
  %s9 = inlined_call_operand.<no memory space> [shape: f32[1,1], index: 9, kind: input, shape index: {}]
  %s10 = inlined_call_operand.hbm [shape: f32[128,128], index: 10, kind: input, shape index: {}]
  %s11 = inlined_call_operand.hbm [shape: f32[128,128], index: 11, kind: input, shape index: {}]
  %s12 = inlined_call_operand.vmem [shape: f32[128,1], index: 12, kind: input, shape index: {}]
  %s13 = inlined_call_operand.vmem [shape: f32[64,128], index: 13, kind: input, shape index: {}]
  %s14 = inlined_call_operand.hbm [shape: f32[64,128], index: 14, kind: input, shape index: {}]
  %s15 = inlined_call_operand.vmem [shape: f32[64,1], index: 15, kind: input, shape index: {}]
  %s16 = inlined_call_operand.vmem [shape: f32[1,64], index: 16, kind: input, shape index: {}]
  %s17 = inlined_call_operand.<no memory space> [shape: f32[1,1], index: 17, kind: input, shape index: {}]
  %s18 = inlined_call_operand.hbm [shape: f32[8,128], index: 18, kind: output, shape index: {}]
  %s19 = sld [smem:[#allocation0]]
  $region114: #{tpu_custom_call.1} parent=0
    _
  %s21 = ssub.s32 1, %s19
  %s22 = scalar_select 0, %s21, %s19
  %v23 = vstv %s9
  %24 = vst [vmem:[#allocation2] sm:$0x1] %v23
  %v25 = vstv %s17
  %26 = vst [vmem:[#allocation3] sm:$0x1] %v25
  $region1: #{tpu_custom_call.1} parent=0
    #allocation4 [shape = 'u8[131072]{0}', space=vmem, size = 0x20000, scoped, tag = 'input window, operand 0, single buffered']
    #allocation5 [shape = 's32[1]{0}', space=sflag, size = 0x4, scoped, tag = 'scoped memory for tpu_custom_call.1']
    #allocation6 [shape = 's32[1]{0}', space=sflag, size = 0x4, scoped, tag = 'scoped memory for tpu_custom_call.1']
    #allocation7 [shape = 'u8[65536]{0}', space=vmem, size = 0x10000, scoped, tag = 'input window, operand 1, single buffered']
    #allocation8 [shape = 's32[1]{0}', space=sflag, size = 0x4, scoped, tag = 'scoped memory for tpu_custom_call.1']
    #allocation9 [shape = 'u8[262144]{0}', space=vmem, size = 0x40000, scoped, tag = 'input window, operand 3, single buffered']
    #allocation10 [shape = 'u8[131072]{0}', space=vmem, size = 0x20000, scoped, tag = 'input window, operand 5, single buffered']
    #allocation11 [shape = 's32[1]{0}', space=sflag, size = 0x4, scoped, tag = 'scoped memory for tpu_custom_call.1']
    #allocation12 [shape = 'u8[131072]{0}', space=vmem, size = 0x20000, scoped, tag = 'input window, operand 6, single buffered']
    #allocation13 [shape = 'u8[65536]{0}', space=vmem, size = 0x10000, scoped, tag = 'input window, operand 10, single buffered']
    #allocation14 [shape = 's32[1]{0}', space=sflag, size = 0x4, scoped, tag = 'scoped memory for tpu_custom_call.1']
    #allocation15 [shape = 'u8[65536]{0}', space=vmem, size = 0x10000, scoped, tag = 'input window, operand 11, single buffered']
    #allocation16 [shape = 'u8[32768]{0}', space=vmem, size = 0x8000, scoped, tag = 'input window, operand 14, single buffered']
    #allocation17 [shape = 's32[1]{0}', space=sflag, size = 0x4, scoped, tag = 'scoped memory for tpu_custom_call.1']
    #allocation18 [shape = 'u8[4096]{0}', space=vmem, size = 0x1000, scoped, tag = 'output window, operand 0, single buffered']
    %27 = vsyncpa [#allocation5], 0
    %28 = vsyncpa [#allocation8], 0
    %29 = vsyncpa [#allocation11], 0
    %30 = vsyncpa [#allocation14], 0
    %31 = vsyncpa [#allocation17], 0
    %32 = vsyncpa [#allocation6], 0
    // Predicated region
    $region2: #{tpu_custom_call.1} parent=1 // pred_check
      _
    $region3: #{tpu_custom_call.1} parent=1 // pred_check_branch
      %34 = sbr.rel (0) target = $region5
    $region4: #{tpu_custom_call.1} parent=1 // pred_region
      %s36 = ssub.s32 4096, 4096
      %37 = vsyncadd [#allocation5], %s36
      %s38 = sshll.u32 [#allocation4], 4
      %s39 = int_to_ptr.vmem [resolvable:$true] %s38
      %44 = dma.hbm_to_vmem [thread:$0]  %s0, 4096, %s39, [#allocation5], 128, 128, 8
    $region5: #{tpu_custom_call.1} parent=1 // pred_fallthru
      _
    // Predicated region
    $region6: #{tpu_custom_call.1} parent=1 // pred_check
      _
    $region7: #{tpu_custom_call.1} parent=1 // pred_check_branch
      %46 = sbr.rel (0) target = $region9
    $region8: #{tpu_custom_call.1} parent=1 // pred_region
      %s48 = ssub.s32 2048, 2048
      %49 = vsyncadd [#allocation8], %s48
      %s50 = sshll.u32 [#allocation7], 4
      %s51 = int_to_ptr.vmem [resolvable:$true] %s50
      %56 = dma.hbm_to_vmem [thread:$0]  %s1, 2048, %s51, [#allocation8], 128, 128, 8
    $region9: #{tpu_custom_call.1} parent=1 // pred_fallthru
      _
    // Predicated region
    $region10: #{tpu_custom_call.1} parent=1 // pred_check
      _
    $region11: #{tpu_custom_call.1} parent=1 // pred_check_branch
      %58 = sbr.rel (0) target = $region13
    $region12: #{tpu_custom_call.1} parent=1 // pred_region
      _
    $region13: #{tpu_custom_call.1} parent=1 // pred_fallthru
      _
    // Predicated region
    $region14: #{tpu_custom_call.1} parent=1 // pred_check
      _
    $region15: #{tpu_custom_call.1} parent=1 // pred_check_branch
      %60 = sbr.rel (0) target = $region17
    $region16: #{tpu_custom_call.1} parent=1 // pred_region
      %s62 = ssub.s32 8192, 8192
      %63 = vsyncadd [#allocation8], %s62
      %s64 = sshll.u32 [#allocation9], 4
      %s65 = int_to_ptr.vmem [resolvable:$true] %s64
      %70 = dma.hbm_to_vmem [thread:$0]  %s3, 8192, %s65, [#allocation8], 256, 256, 16
    $region17: #{tpu_custom_call.1} parent=1 // pred_fallthru
      _
    // Predicated region
    $region18: #{tpu_custom_call.1} parent=1 // pred_check
      _
    $region19: #{tpu_custom_call.1} parent=1 // pred_check_branch
      %72 = sbr.rel (0) target = $region21
    $region20: #{tpu_custom_call.1} parent=1 // pred_region
      _
    $region21: #{tpu_custom_call.1} parent=1 // pred_fallthru
      _
    // Predicated region
    $region22: #{tpu_custom_call.1} parent=1 // pred_check
      _
    $region23: #{tpu_custom_call.1} parent=1 // pred_check_branch
      %74 = sbr.rel (0) target = $region25
    $region24: #{tpu_custom_call.1} parent=1 // pred_region
      %s76 = ssub.s32 4096, 4096
      %77 = vsyncadd [#allocation11], %s76
      %s78 = sshll.u32 [#allocation10], 4
      %s79 = int_to_ptr.vmem [resolvable:$true] %s78
      %84 = dma.hbm_to_vmem [thread:$0]  %s5, 4096, %s79, [#allocation11], 256, 256, 16
    $region25: #{tpu_custom_call.1} parent=1 // pred_fallthru
      _
    // Predicated region
    $region26: #{tpu_custom_call.1} parent=1 // pred_check
      _
    $region27: #{tpu_custom_call.1} parent=1 // pred_check_branch
      %86 = sbr.rel (0) target = $region29
    $region28: #{tpu_custom_call.1} parent=1 // pred_region
      %s88 = ssub.s32 4096, 4096
      %89 = vsyncadd [#allocation11], %s88
      %s90 = sshll.u32 [#allocation12], 4
      %s91 = int_to_ptr.vmem [resolvable:$true] %s90
      %96 = dma.hbm_to_vmem [thread:$0]  %s6, 4096, %s91, [#allocation11], 256, 256, 16
    $region29: #{tpu_custom_call.1} parent=1 // pred_fallthru
      _
    // Predicated region
    $region30: #{tpu_custom_call.1} parent=1 // pred_check
      _
    $region31: #{tpu_custom_call.1} parent=1 // pred_check_branch
      %98 = sbr.rel (0) target = $region33
    $region32: #{tpu_custom_call.1} parent=1 // pred_region
      _
    $region33: #{tpu_custom_call.1} parent=1 // pred_fallthru
      _
    // Predicated region
    $region34: #{tpu_custom_call.1} parent=1 // pred_check
      _
    $region35: #{tpu_custom_call.1} parent=1 // pred_check_branch
      %100 = sbr.rel (0) target = $region37
    $region36: #{tpu_custom_call.1} parent=1 // pred_region
      _
    $region37: #{tpu_custom_call.1} parent=1 // pred_fallthru
      _
    // Predicated region
    $region38: #{tpu_custom_call.1} parent=1 // pred_check
      _
    $region39: #{tpu_custom_call.1} parent=1 // pred_check_branch
      %102 = sbr.rel (0) target = $region41
    $region40: #{tpu_custom_call.1} parent=1 // pred_region
      _
    $region41: #{tpu_custom_call.1} parent=1 // pred_fallthru
      _
    // Predicated region
    $region42: #{tpu_custom_call.1} parent=1 // pred_check
      _
    $region43: #{tpu_custom_call.1} parent=1 // pred_check_branch
      %104 = sbr.rel (0) target = $region45
    $region44: #{tpu_custom_call.1} parent=1 // pred_region
      %s106 = ssub.s32 2048, 2048
      %107 = vsyncadd [#allocation14], %s106
      %s108 = sshll.u32 [#allocation13], 4
      %s109 = int_to_ptr.vmem [resolvable:$true] %s108
      %114 = dma.hbm_to_vmem [thread:$0]  %s10, 2048, %s109, [#allocation14], 128, 128, 8
    $region45: #{tpu_custom_call.1} parent=1 // pred_fallthru
      _
    // Predicated region
    $region46: #{tpu_custom_call.1} parent=1 // pred_check
      _
    $region47: #{tpu_custom_call.1} parent=1 // pred_check_branch
      %116 = sbr.rel (0) target = $region49
    $region48: #{tpu_custom_call.1} parent=1 // pred_region
      %s118 = ssub.s32 2048, 2048
      %119 = vsyncadd [#allocation14], %s118
      %s120 = sshll.u32 [#allocation15], 4
      %s121 = int_to_ptr.vmem [resolvable:$true] %s120
      %126 = dma.hbm_to_vmem [thread:$0]  %s11, 2048, %s121, [#allocation14], 128, 128, 8
    $region49: #{tpu_custom_call.1} parent=1 // pred_fallthru
      _
    // Predicated region
    $region50: #{tpu_custom_call.1} parent=1 // pred_check
      _
    $region51: #{tpu_custom_call.1} parent=1 // pred_check_branch
      %128 = sbr.rel (0) target = $region53
    $region52: #{tpu_custom_call.1} parent=1 // pred_region
      _
    $region53: #{tpu_custom_call.1} parent=1 // pred_fallthru
      _
    // Predicated region
    $region54: #{tpu_custom_call.1} parent=1 // pred_check
      _
    $region55: #{tpu_custom_call.1} parent=1 // pred_check_branch
      %130 = sbr.rel (0) target = $region57
    $region56: #{tpu_custom_call.1} parent=1 // pred_region
      _
    $region57: #{tpu_custom_call.1} parent=1 // pred_fallthru
      _
    // Predicated region
    $region58: #{tpu_custom_call.1} parent=1 // pred_check
      _
    $region59: #{tpu_custom_call.1} parent=1 // pred_check_branch
      %132 = sbr.rel (0) target = $region61
    $region60: #{tpu_custom_call.1} parent=1 // pred_region
      %s134 = ssub.s32 1024, 1024
      %135 = vsyncadd [#allocation17], %s134
      %s136 = sshll.u32 [#allocation16], 4
      %s137 = int_to_ptr.vmem [resolvable:$true] %s136
      %142 = dma.hbm_to_vmem [thread:$0]  %s14, 1024, %s137, [#allocation17], 128, 128, 8
    $region61: #{tpu_custom_call.1} parent=1 // pred_fallthru
      _
    // Predicated region
    $region62: #{tpu_custom_call.1} parent=1 // pred_check
      _
    $region63: #{tpu_custom_call.1} parent=1 // pred_check_branch
      %144 = sbr.rel (0) target = $region65
    $region64: #{tpu_custom_call.1} parent=1 // pred_region
      _
    $region65: #{tpu_custom_call.1} parent=1 // pred_fallthru
      _
    // Predicated region
    $region66: #{tpu_custom_call.1} parent=1 // pred_check
      _
    $region67: #{tpu_custom_call.1} parent=1 // pred_check_branch
      %146 = sbr.rel (0) target = $region69
    $region68: #{tpu_custom_call.1} parent=1 // pred_region
      _
    $region69: #{tpu_custom_call.1} parent=1 // pred_fallthru
      _
    // Predicated region
    $region70: #{tpu_custom_call.1} parent=1 // pred_check
      _
    $region71: #{tpu_custom_call.1} parent=1 // pred_check_branch
      %148 = sbr.rel (0) target = $region73
    $region72: #{tpu_custom_call.1} parent=1 // pred_region
      _
    $region73: #{tpu_custom_call.1} parent=1 // pred_fallthru
      _
    // Predicated region
    $region74: #{tpu_custom_call.1} parent=1 // pred_check
      _
    $region75: #{tpu_custom_call.1} parent=1 // pred_check_branch
      %150 = sbr.rel (0) target = $region77
    $region76: #{tpu_custom_call.1} parent=1 // pred_region
      %151 = dma.done [#allocation5], 4096
    $region77: #{tpu_custom_call.1} parent=1 // pred_fallthru
      _
    // Predicated region
    $region78: #{tpu_custom_call.1} parent=1 // pred_check
      _
    $region79: #{tpu_custom_call.1} parent=1 // pred_check_branch
      %153 = sbr.rel (0) target = $region81
    $region80: #{tpu_custom_call.1} parent=1 // pred_region
      %154 = dma.done [#allocation8], 2048
    $region81: #{tpu_custom_call.1} parent=1 // pred_fallthru
      _
    // Predicated region
    $region82: #{tpu_custom_call.1} parent=1 // pred_check
      _
    $region83: #{tpu_custom_call.1} parent=1 // pred_check_branch
      %156 = sbr.rel (0) target = $region85
    $region84: #{tpu_custom_call.1} parent=1 // pred_region
      %157 = dma.done [#allocation8], 8192
    $region85: #{tpu_custom_call.1} parent=1 // pred_fallthru
      _
    // Predicated region
    $region86: #{tpu_custom_call.1} parent=1 // pred_check
      _
    $region87: #{tpu_custom_call.1} parent=1 // pred_check_branch
      %159 = sbr.rel (0) target = $region89
    $region88: #{tpu_custom_call.1} parent=1 // pred_region
      %160 = dma.done [#allocation11], 4096
    $region89: #{tpu_custom_call.1} parent=1 // pred_fallthru
      _
    // Predicated region
    $region90: #{tpu_custom_call.1} parent=1 // pred_check
      _
    $region91: #{tpu_custom_call.1} parent=1 // pred_check_branch
      %162 = sbr.rel (0) target = $region93
    $region92: #{tpu_custom_call.1} parent=1 // pred_region
      %163 = dma.done [#allocation11], 4096
    $region93: #{tpu_custom_call.1} parent=1 // pred_fallthru
      _
    // Predicated region
    $region94: #{tpu_custom_call.1} parent=1 // pred_check
      _
    $region95: #{tpu_custom_call.1} parent=1 // pred_check_branch
      %165 = sbr.rel (0) target = $region97
    $region96: #{tpu_custom_call.1} parent=1 // pred_region
      %166 = dma.done [#allocation14], 2048
    $region97: #{tpu_custom_call.1} parent=1 // pred_fallthru
      _
    // Predicated region
    $region98: #{tpu_custom_call.1} parent=1 // pred_check
      _
    $region99: #{tpu_custom_call.1} parent=1 // pred_check_branch
      %168 = sbr.rel (0) target = $region101
    $region100: #{tpu_custom_call.1} parent=1 // pred_region
      %169 = dma.done [#allocation14], 2048
    $region101: #{tpu_custom_call.1} parent=1 // pred_fallthru
      _
    // Predicated region
    $region102: #{tpu_custom_call.1} parent=1 // pred_check
      _
    $region103: #{tpu_custom_call.1} parent=1 // pred_check_branch
      %171 = sbr.rel (0) target = $region105
    $region104: #{tpu_custom_call.1} parent=1 // pred_region
      %172 = dma.done [#allocation17], 1024
    $region105: #{tpu_custom_call.1} parent=1 // pred_fallthru
      _
    %v173 = vld [vmem:[#allocation4] sm:$0xff]
    %v174 = vld [vmem:[#allocation4 + $0x8] sm:$0xff]
    %v175 = vld [vmem:[#allocation4 + $0x10] sm:$0xff]
    %v176 = vld [vmem:[#allocation4 + $0x18] sm:$0xff]
    %v177 = vld [vmem:[#allocation4 + $0x20] sm:$0xff]
    %v178 = vld [vmem:[#allocation4 + $0x28] sm:$0xff]
    %v179 = vld [vmem:[#allocation4 + $0x30] sm:$0xff]
    %v180 = vld [vmem:[#allocation4 + $0x38] sm:$0xff]
    %v181 = vld [vmem:[#allocation4 + $0x40] sm:$0xff]
    %v182 = vld [vmem:[#allocation4 + $0x48] sm:$0xff]
    %v183 = vld [vmem:[#allocation4 + $0x50] sm:$0xff]
    %v184 = vld [vmem:[#allocation4 + $0x58] sm:$0xff]
    %v185 = vld [vmem:[#allocation4 + $0x60] sm:$0xff]
    %v186 = vld [vmem:[#allocation4 + $0x68] sm:$0xff]
    %v187 = vld [vmem:[#allocation4 + $0x70] sm:$0xff]
    %v188 = vld [vmem:[#allocation4 + $0x78] sm:$0xff]
    %v189 = vld [vmem:[#allocation4 + $0x80] sm:$0xff]
    %v190 = vld [vmem:[#allocation4 + $0x88] sm:$0xff]
    %v191 = vld [vmem:[#allocation4 + $0x90] sm:$0xff]
    %v192 = vld [vmem:[#allocation4 + $0x98] sm:$0xff]
    %v193 = vld [vmem:[#allocation4 + $0xa0] sm:$0xff]
    %v194 = vld [vmem:[#allocation4 + $0xa8] sm:$0xff]
    %v195 = vld [vmem:[#allocation4 + $0xb0] sm:$0xff]
    %v196 = vld [vmem:[#allocation4 + $0xb8] sm:$0xff]
    %v197 = vld [vmem:[#allocation4 + $0xc0] sm:$0xff]
    %v198 = vld [vmem:[#allocation4 + $0xc8] sm:$0xff]
    %v199 = vld [vmem:[#allocation4 + $0xd0] sm:$0xff]
    %v200 = vld [vmem:[#allocation4 + $0xd8] sm:$0xff]
    %v201 = vld [vmem:[#allocation4 + $0xe0] sm:$0xff]
    %v202 = vld [vmem:[#allocation4 + $0xe8] sm:$0xff]
    %v203 = vld [vmem:[#allocation4 + $0xf0] sm:$0xff]
    %v204 = vld [vmem:[#allocation4 + $0xf8] sm:$0xff]
    %v205 = vld [vmem:[%s2] sm:$0xff]
    %v206 = vld [vmem:[%s2 + $0x8] sm:$0xff]
    %v207 = vld [vmem:[%s2 + $0x10] sm:$0xff]
    %v208 = vld [vmem:[%s2 + $0x18] sm:$0xff]
    %v209 = vld [vmem:[%s2 + $0x20] sm:$0xff]
    %v210 = vld [vmem:[%s2 + $0x28] sm:$0xff]
    %v211 = vld [vmem:[%s2 + $0x30] sm:$0xff]
    %v212 = vld [vmem:[%s2 + $0x38] sm:$0xff]
    %v213 = vld [vmem:[%s2 + $0x40] sm:$0xff]
    %v214 = vld [vmem:[%s2 + $0x48] sm:$0xff]
    %v215 = vld [vmem:[%s2 + $0x50] sm:$0xff]
    %v216 = vld [vmem:[%s2 + $0x58] sm:$0xff]
    %v217 = vld [vmem:[%s2 + $0x60] sm:$0xff]
    %v218 = vld [vmem:[%s2 + $0x68] sm:$0xff]
    %v219 = vld [vmem:[%s2 + $0x70] sm:$0xff]
    %v220 = vld [vmem:[%s2 + $0x78] sm:$0xff]
    %v221 = vld [vmem:[%s2 + $0x80] sm:$0xff]
    %v222 = vld [vmem:[%s2 + $0x88] sm:$0xff]
    %v223 = vld [vmem:[%s2 + $0x90] sm:$0xff]
    %v224 = vld [vmem:[%s2 + $0x98] sm:$0xff]
    %v225 = vld [vmem:[%s2 + $0xa0] sm:$0xff]
    %v226 = vld [vmem:[%s2 + $0xa8] sm:$0xff]
    %v227 = vld [vmem:[%s2 + $0xb0] sm:$0xff]
    %v228 = vld [vmem:[%s2 + $0xb8] sm:$0xff]
    %v229 = vld [vmem:[%s2 + $0xc0] sm:$0xff]
    %v230 = vld [vmem:[%s2 + $0xc8] sm:$0xff]
    %v231 = vld [vmem:[%s2 + $0xd0] sm:$0xff]
    %v232 = vld [vmem:[%s2 + $0xd8] sm:$0xff]
    %v233 = vld [vmem:[%s2 + $0xe0] sm:$0xff]
    %v234 = vld [vmem:[%s2 + $0xe8] sm:$0xff]
    %v235 = vld [vmem:[%s2 + $0xf0] sm:$0xff]
    %v236 = vld [vmem:[%s2 + $0xf8] sm:$0xff]
    %v237 = vld [vmem:[%s2 + $0x100] sm:$0xff]
    %v238 = vld [vmem:[%s2 + $0x108] sm:$0xff]
    %v239 = vld [vmem:[%s2 + $0x110] sm:$0xff]
    %v240 = vld [vmem:[%s2 + $0x118] sm:$0xff]
    %v241 = vld [vmem:[%s2 + $0x120] sm:$0xff]
    %v242 = vld [vmem:[%s2 + $0x128] sm:$0xff]
    %v243 = vld [vmem:[%s2 + $0x130] sm:$0xff]
    %v244 = vld [vmem:[%s2 + $0x138] sm:$0xff]
    %v245 = vld [vmem:[%s2 + $0x140] sm:$0xff]
    %v246 = vld [vmem:[%s2 + $0x148] sm:$0xff]
    %v247 = vld [vmem:[%s2 + $0x150] sm:$0xff]
    %v248 = vld [vmem:[%s2 + $0x158] sm:$0xff]
    %v249 = vld [vmem:[%s2 + $0x160] sm:$0xff]
    %v250 = vld [vmem:[%s2 + $0x168] sm:$0xff]
    %v251 = vld [vmem:[%s2 + $0x170] sm:$0xff]
    %v252 = vld [vmem:[%s2 + $0x178] sm:$0xff]
    %v253 = vld [vmem:[%s2 + $0x180] sm:$0xff]
    %v254 = vld [vmem:[%s2 + $0x188] sm:$0xff]
    %v255 = vld [vmem:[%s2 + $0x190] sm:$0xff]
    %v256 = vld [vmem:[%s2 + $0x198] sm:$0xff]
    %v257 = vld [vmem:[%s2 + $0x1a0] sm:$0xff]
    %v258 = vld [vmem:[%s2 + $0x1a8] sm:$0xff]
    %v259 = vld [vmem:[%s2 + $0x1b0] sm:$0xff]
    %v260 = vld [vmem:[%s2 + $0x1b8] sm:$0xff]
    %v261 = vld [vmem:[%s2 + $0x1c0] sm:$0xff]
    %v262 = vld [vmem:[%s2 + $0x1c8] sm:$0xff]
    %v263 = vld [vmem:[%s2 + $0x1d0] sm:$0xff]
    %v264 = vld [vmem:[%s2 + $0x1d8] sm:$0xff]
    %v265 = vld [vmem:[%s2 + $0x1e0] sm:$0xff]
    %v266 = vld [vmem:[%s2 + $0x1e8] sm:$0xff]
    %v267 = vld [vmem:[%s2 + $0x1f0] sm:$0xff]
    %v268 = vld [vmem:[%s2 + $0x1f8] sm:$0xff]
    %v269 = vld [vmem:[#allocation9] sm:$0xff]
    %v270 = vld [vmem:[#allocation9 + $0x8] sm:$0xff]
    %v271 = vld [vmem:[#allocation9 + $0x10] sm:$0xff]
    %v272 = vld [vmem:[#allocation9 + $0x18] sm:$0xff]
    %v273 = vld [vmem:[#allocation9 + $0x20] sm:$0xff]
    %v274 = vld [vmem:[#allocation9 + $0x28] sm:$0xff]
    %v275 = vld [vmem:[#allocation9 + $0x30] sm:$0xff]
    %v276 = vld [vmem:[#allocation9 + $0x38] sm:$0xff]
    %v277 = vld [vmem:[#allocation9 + $0x40] sm:$0xff]
    %v278 = vld [vmem:[#allocation9 + $0x48] sm:$0xff]
    %v279 = vld [vmem:[#allocation9 + $0x50] sm:$0xff]
    %v280 = vld [vmem:[#allocation9 + $0x58] sm:$0xff]
    %v281 = vld [vmem:[#allocation9 + $0x60] sm:$0xff]
    %v282 = vld [vmem:[#allocation9 + $0x68] sm:$0xff]
    %v283 = vld [vmem:[#allocation9 + $0x70] sm:$0xff]
    %v284 = vld [vmem:[#allocation9 + $0x78] sm:$0xff]
    %v285 = vld [vmem:[#allocation9 + $0x80] sm:$0xff]
    %v286 = vld [vmem:[#allocation9 + $0x88] sm:$0xff]
    %v287 = vld [vmem:[#allocation9 + $0x90] sm:$0xff]
    %v288 = vld [vmem:[#allocation9 + $0x98] sm:$0xff]
    %v289 = vld [vmem:[#allocation9 + $0xa0] sm:$0xff]
    %v290 = vld [vmem:[#allocation9 + $0xa8] sm:$0xff]
    %v291 = vld [vmem:[#allocation9 + $0xb0] sm:$0xff]
    %v292 = vld [vmem:[#allocation9 + $0xb8] sm:$0xff]
    %v293 = vld [vmem:[#allocation9 + $0xc0] sm:$0xff]
    %v294 = vld [vmem:[#allocation9 + $0xc8] sm:$0xff]
    %v295 = vld [vmem:[#allocation9 + $0xd0] sm:$0xff]
    %v296 = vld [vmem:[#allocation9 + $0xd8] sm:$0xff]
    %v297 = vld [vmem:[#allocation9 + $0xe0] sm:$0xff]
    %v298 = vld [vmem:[#allocation9 + $0xe8] sm:$0xff]
    %v299 = vld [vmem:[#allocation9 + $0xf0] sm:$0xff]
    %v300 = vld [vmem:[#allocation9 + $0xf8] sm:$0xff]
    %v301 = vld [vmem:[#allocation9 + $0x100] sm:$0xff]
    %v302 = vld [vmem:[#allocation9 + $0x108] sm:$0xff]
    %v303 = vld [vmem:[#allocation9 + $0x110] sm:$0xff]
    %v304 = vld [vmem:[#allocation9 + $0x118] sm:$0xff]
    %v305 = vld [vmem:[#allocation9 + $0x120] sm:$0xff]
    %v306 = vld [vmem:[#allocation9 + $0x128] sm:$0xff]
    %v307 = vld [vmem:[#allocation9 + $0x130] sm:$0xff]
    %v308 = vld [vmem:[#allocation9 + $0x138] sm:$0xff]
    %v309 = vld [vmem:[#allocation9 + $0x140] sm:$0xff]
    %v310 = vld [vmem:[#allocation9 + $0x148] sm:$0xff]
    %v311 = vld [vmem:[#allocation9 + $0x150] sm:$0xff]
    %v312 = vld [vmem:[#allocation9 + $0x158] sm:$0xff]
    %v313 = vld [vmem:[#allocation9 + $0x160] sm:$0xff]
    %v314 = vld [vmem:[#allocation9 + $0x168] sm:$0xff]
    %v315 = vld [vmem:[#allocation9 + $0x170] sm:$0xff]
    %v316 = vld [vmem:[#allocation9 + $0x178] sm:$0xff]
    %v317 = vld [vmem:[#allocation9 + $0x180] sm:$0xff]
    %v318 = vld [vmem:[#allocation9 + $0x188] sm:$0xff]
    %v319 = vld [vmem:[#allocation9 + $0x190] sm:$0xff]
    %v320 = vld [vmem:[#allocation9 + $0x198] sm:$0xff]
    %v321 = vld [vmem:[#allocation9 + $0x1a0] sm:$0xff]
    %v322 = vld [vmem:[#allocation9 + $0x1a8] sm:$0xff]
    %v323 = vld [vmem:[#allocation9 + $0x1b0] sm:$0xff]
    %v324 = vld [vmem:[#allocation9 + $0x1b8] sm:$0xff]
    %v325 = vld [vmem:[#allocation9 + $0x1c0] sm:$0xff]
    %v326 = vld [vmem:[#allocation9 + $0x1c8] sm:$0xff]
    %v327 = vld [vmem:[#allocation9 + $0x1d0] sm:$0xff]
    %v328 = vld [vmem:[#allocation9 + $0x1d8] sm:$0xff]
    %v329 = vld [vmem:[#allocation9 + $0x1e0] sm:$0xff]
    %v330 = vld [vmem:[#allocation9 + $0x1e8] sm:$0xff]
    %v331 = vld [vmem:[#allocation9 + $0x1f0] sm:$0xff]
    %v332 = vld [vmem:[#allocation9 + $0x1f8] sm:$0xff]
    %v333 = vld [vmem:[%s4] sm:$0xff]
    %v334 = vld [vmem:[%s4 + $0x8] sm:$0xff]
    %v335 = vld [vmem:[%s4 + $0x10] sm:$0xff]
    %v336 = vld [vmem:[%s4 + $0x18] sm:$0xff]
    %v337 = vld [vmem:[%s4 + $0x20] sm:$0xff]
    %v338 = vld [vmem:[%s4 + $0x28] sm:$0xff]
    %v339 = vld [vmem:[%s4 + $0x30] sm:$0xff]
    %v340 = vld [vmem:[%s4 + $0x38] sm:$0xff]
    %v341 = vld [vmem:[%s4 + $0x40] sm:$0xff]
    %v342 = vld [vmem:[%s4 + $0x48] sm:$0xff]
    %v343 = vld [vmem:[%s4 + $0x50] sm:$0xff]
    %v344 = vld [vmem:[%s4 + $0x58] sm:$0xff]
    %v345 = vld [vmem:[%s4 + $0x60] sm:$0xff]
    %v346 = vld [vmem:[%s4 + $0x68] sm:$0xff]
    %v347 = vld [vmem:[%s4 + $0x70] sm:$0xff]
    %v348 = vld [vmem:[%s4 + $0x78] sm:$0xff]
    %v349 = vld [vmem:[%s4 + $0x80] sm:$0xff]
    %v350 = vld [vmem:[%s4 + $0x88] sm:$0xff]
    %v351 = vld [vmem:[%s4 + $0x90] sm:$0xff]
    %v352 = vld [vmem:[%s4 + $0x98] sm:$0xff]
    %v353 = vld [vmem:[%s4 + $0xa0] sm:$0xff]
    %v354 = vld [vmem:[%s4 + $0xa8] sm:$0xff]
    %v355 = vld [vmem:[%s4 + $0xb0] sm:$0xff]
    %v356 = vld [vmem:[%s4 + $0xb8] sm:$0xff]
    %v357 = vld [vmem:[%s4 + $0xc0] sm:$0xff]
    %v358 = vld [vmem:[%s4 + $0xc8] sm:$0xff]
    %v359 = vld [vmem:[%s4 + $0xd0] sm:$0xff]
    %v360 = vld [vmem:[%s4 + $0xd8] sm:$0xff]
    %v361 = vld [vmem:[%s4 + $0xe0] sm:$0xff]
    %v362 = vld [vmem:[%s4 + $0xe8] sm:$0xff]
    %v363 = vld [vmem:[%s4 + $0xf0] sm:$0xff]
    %v364 = vld [vmem:[%s4 + $0xf8] sm:$0xff]
    %v365 = vld [vmem:[#allocation10] sm:$0xff]
    %v366 = vld [vmem:[#allocation10 + $0x8] sm:$0xff]
    %v367 = vld [vmem:[#allocation10 + $0x10] sm:$0xff]
    %v368 = vld [vmem:[#allocation10 + $0x18] sm:$0xff]
    %v369 = vld [vmem:[#allocation10 + $0x20] sm:$0xff]
    %v370 = vld [vmem:[#allocation10 + $0x28] sm:$0xff]
    %v371 = vld [vmem:[#allocation10 + $0x30] sm:$0xff]
    %v372 = vld [vmem:[#allocation10 + $0x38] sm:$0xff]
    %v373 = vld [vmem:[#allocation10 + $0x40] sm:$0xff]
    %v374 = vld [vmem:[#allocation10 + $0x48] sm:$0xff]
    %v375 = vld [vmem:[#allocation10 + $0x50] sm:$0xff]
    %v376 = vld [vmem:[#allocation10 + $0x58] sm:$0xff]
    %v377 = vld [vmem:[#allocation10 + $0x60] sm:$0xff]
    %v378 = vld [vmem:[#allocation10 + $0x68] sm:$0xff]
    %v379 = vld [vmem:[#allocation10 + $0x70] sm:$0xff]
    %v380 = vld [vmem:[#allocation10 + $0x78] sm:$0xff]
    %v381 = vld [vmem:[#allocation10 + $0x80] sm:$0xff]
    %v382 = vld [vmem:[#allocation10 + $0x88] sm:$0xff]
    %v383 = vld [vmem:[#allocation10 + $0x90] sm:$0xff]
    %v384 = vld [vmem:[#allocation10 + $0x98] sm:$0xff]
    %v385 = vld [vmem:[#allocation10 + $0xa0] sm:$0xff]
    %v386 = vld [vmem:[#allocation10 + $0xa8] sm:$0xff]
    %v387 = vld [vmem:[#allocation10 + $0xb0] sm:$0xff]
    %v388 = vld [vmem:[#allocation10 + $0xb8] sm:$0xff]
    %v389 = vld [vmem:[#allocation10 + $0xc0] sm:$0xff]
    %v390 = vld [vmem:[#allocation10 + $0xc8] sm:$0xff]
    %v391 = vld [vmem:[#allocation10 + $0xd0] sm:$0xff]
    %v392 = vld [vmem:[#allocation10 + $0xd8] sm:$0xff]
    %v393 = vld [vmem:[#allocation10 + $0xe0] sm:$0xff]
    %v394 = vld [vmem:[#allocation10 + $0xe8] sm:$0xff]
    %v395 = vld [vmem:[#allocation10 + $0xf0] sm:$0xff]
    %v396 = vld [vmem:[#allocation10 + $0xf8] sm:$0xff]
    %v397 = vld [vmem:[#allocation12] sm:$0xff]
    %v398 = vld [vmem:[#allocation12 + $0x8] sm:$0xff]
    %v399 = vld [vmem:[#allocation12 + $0x10] sm:$0xff]
    %v400 = vld [vmem:[#allocation12 + $0x18] sm:$0xff]
    %v401 = vld [vmem:[#allocation12 + $0x20] sm:$0xff]
    %v402 = vld [vmem:[#allocation12 + $0x28] sm:$0xff]
    %v403 = vld [vmem:[#allocation12 + $0x30] sm:$0xff]
    %v404 = vld [vmem:[#allocation12 + $0x38] sm:$0xff]
    %v405 = vld [vmem:[#allocation12 + $0x40] sm:$0xff]
    %v406 = vld [vmem:[#allocation12 + $0x48] sm:$0xff]
    %v407 = vld [vmem:[#allocation12 + $0x50] sm:$0xff]
    %v408 = vld [vmem:[#allocation12 + $0x58] sm:$0xff]
    %v409 = vld [vmem:[#allocation12 + $0x60] sm:$0xff]
    %v410 = vld [vmem:[#allocation12 + $0x68] sm:$0xff]
    %v411 = vld [vmem:[#allocation12 + $0x70] sm:$0xff]
    %v412 = vld [vmem:[#allocation12 + $0x78] sm:$0xff]
    %v413 = vld [vmem:[#allocation12 + $0x80] sm:$0xff]
    %v414 = vld [vmem:[#allocation12 + $0x88] sm:$0xff]
    %v415 = vld [vmem:[#allocation12 + $0x90] sm:$0xff]
    %v416 = vld [vmem:[#allocation12 + $0x98] sm:$0xff]
    %v417 = vld [vmem:[#allocation12 + $0xa0] sm:$0xff]
    %v418 = vld [vmem:[#allocation12 + $0xa8] sm:$0xff]
    %v419 = vld [vmem:[#allocation12 + $0xb0] sm:$0xff]
    %v420 = vld [vmem:[#allocation12 + $0xb8] sm:$0xff]
    %v421 = vld [vmem:[#allocation12 + $0xc0] sm:$0xff]
    %v422 = vld [vmem:[#allocation12 + $0xc8] sm:$0xff]
    %v423 = vld [vmem:[#allocation12 + $0xd0] sm:$0xff]
    %v424 = vld [vmem:[#allocation12 + $0xd8] sm:$0xff]
    %v425 = vld [vmem:[#allocation12 + $0xe0] sm:$0xff]
    %v426 = vld [vmem:[#allocation12 + $0xe8] sm:$0xff]
    %v427 = vld [vmem:[#allocation12 + $0xf0] sm:$0xff]
    %v428 = vld [vmem:[#allocation12 + $0xf8] sm:$0xff]
    %v429 = vld [vmem:[%s7] sm:$0xff]
    %v430 = vld [vmem:[%s7 + $0x8] sm:$0xff]
    %v431 = vld [vmem:[%s7 + $0x10] sm:$0xff]
    %v432 = vld [vmem:[%s7 + $0x18] sm:$0xff]
    %v433 = vld [vmem:[%s7 + $0x20] sm:$0xff]
    %v434 = vld [vmem:[%s7 + $0x28] sm:$0xff]
    %v435 = vld [vmem:[%s7 + $0x30] sm:$0xff]
    %v436 = vld [vmem:[%s7 + $0x38] sm:$0xff]
    %v437 = vld [vmem:[%s7 + $0x40] sm:$0xff]
    %v438 = vld [vmem:[%s7 + $0x48] sm:$0xff]
    %v439 = vld [vmem:[%s7 + $0x50] sm:$0xff]
    %v440 = vld [vmem:[%s7 + $0x58] sm:$0xff]
    %v441 = vld [vmem:[%s7 + $0x60] sm:$0xff]
    %v442 = vld [vmem:[%s7 + $0x68] sm:$0xff]
    %v443 = vld [vmem:[%s7 + $0x70] sm:$0xff]
    %v444 = vld [vmem:[%s7 + $0x78] sm:$0xff]
    %v445 = vld [vmem:[%s8] sm:$0x1]
    %v446 = vld [vmem:[#allocation2] sm:$0x1]
    %447 = vmatprep.subr.mxu0 0.0
    %448 = vmatpush1.msra.mxu0 %v188
    %449 = vmatprep.subr.mxu0 0.0
    %450 = vmatpush1.msra.mxu0 %v187
    %451 = vmatprep.subr.mxu0 0.0
    %452 = vmatpush1.msra.mxu0 %v186
    %453 = vmatprep.subr.mxu0 0.0
    %454 = vmatpush1.msra.mxu0 %v185
    %455 = vmatprep.subr.mxu0 0.0
    %456 = vmatpush1.msra.mxu0 %v184
    %457 = vmatprep.subr.mxu0 0.0
    %458 = vmatpush1.msra.mxu0 %v183
    %459 = vmatprep.subr.mxu0 0.0
    %460 = vmatpush1.msra.mxu0 %v182
    %461 = vmatprep.subr.mxu0 0.0
    %462 = vmatpush1.msra.mxu0 %v181
    %463 = vmatprep.subr.mxu0 0.0
    %464 = vmatpush1.msra.mxu0 %v180
    %465 = vmatprep.subr.mxu0 0.0
    %466 = vmatpush1.msra.mxu0 %v179
    %467 = vmatprep.subr.mxu0 0.0
    %468 = vmatpush1.msra.mxu0 %v178
    %469 = vmatprep.subr.mxu0 0.0
    %470 = vmatpush1.msra.mxu0 %v177
    %471 = vmatprep.subr.mxu0 0.0
    %472 = vmatpush1.msra.mxu0 %v176
    %473 = vmatprep.subr.mxu0 0.0
    %474 = vmatpush1.msra.mxu0 %v175
    %475 = vmatprep.subr.mxu0 0.0
    %476 = vmatpush1.msra.mxu0 %v174
    %477 = vmatprep.subr.mxu0 0.0
    %478 = vmatpush1.msra.mxu0 %v173
    %479 = vmatprep.subr.mxu0 0.0
    %480 = vmatpush2.msra.mxu0 %v204
    %481 = vmatprep.subr.mxu0 0.0
    %482 = vmatpush2.msra.mxu0 %v203
    %483 = vmatprep.subr.mxu0 0.0
    %484 = vmatpush2.msra.mxu0 %v202
    %485 = vmatprep.subr.mxu0 0.0
    %486 = vmatpush2.msra.mxu0 %v201
    %487 = vmatprep.subr.mxu0 0.0
    %488 = vmatpush2.msra.mxu0 %v200
    %489 = vmatprep.subr.mxu0 0.0
    %490 = vmatpush2.msra.mxu0 %v199
    %491 = vmatprep.subr.mxu0 0.0
    %492 = vmatpush2.msra.mxu0 %v198
    %493 = vmatprep.subr.mxu0 0.0
    %494 = vmatpush2.msra.mxu0 %v197
    %495 = vmatprep.subr.mxu0 0.0
    %496 = vmatpush2.msra.mxu0 %v196
    %497 = vmatprep.subr.mxu0 0.0
    %498 = vmatpush2.msra.mxu0 %v195
    %499 = vmatprep.subr.mxu0 0.0
    %500 = vmatpush2.msra.mxu0 %v194
    %501 = vmatprep.subr.mxu0 0.0
    %502 = vmatpush2.msra.mxu0 %v193
    %503 = vmatprep.subr.mxu0 0.0
    %504 = vmatpush2.msra.mxu0 %v192
    %505 = vmatprep.subr.mxu0 0.0
    %506 = vmatpush2.msra.mxu0 %v191
    %507 = vmatprep.subr.mxu0 0.0
    %508 = vmatpush2.msra.mxu0 %v190
    %509 = vmatprep.subr.mxu0 0.0
    %510 = vmatpush2.msra.mxu0 %v189
    %511 = vmatprep.mubr.f32.mxu0 %v206
    %512 = vmatmul.mubr.f32.gmra.mxu0 %v205
    %v513 = vpop.f32.mrf.mxu0
    %v514 = vadd.f32 0.0, %v513
    %v515 = vpop.f32.mrf.mxu0
    %516 = vmatprep.mubr.f32.mxu0 %v208
    %517 = vmatmul.mubr.f32.gmra.mxu0 %v207
    %v518 = vpop.f32.mrf.mxu0
    %v519 = vadd.f32 0.0, %v518
    %v520 = vpop.f32.mrf.mxu0
    %521 = vmatprep.mubr.f32.mxu0 %v210
    %522 = vmatmul.mubr.f32.gmra.mxu0 %v209
    %v523 = vpop.f32.mrf.mxu0
    %v524 = vadd.f32 0.0, %v523
    %v525 = vpop.f32.mrf.mxu0
    %526 = vmatprep.mubr.f32.mxu0 %v212
    %527 = vmatmul.mubr.f32.gmra.mxu0 %v211
    %v528 = vpop.f32.mrf.mxu0
    %v529 = vadd.f32 0.0, %v528
    %v530 = vpop.f32.mrf.mxu0
    %531 = vmatprep.mubr.f32.mxu0 %v214
    %532 = vmatmul.mubr.f32.gmra.mxu0 %v213
    %v533 = vpop.f32.mrf.mxu0
    %v534 = vadd.f32 0.0, %v533
    %v535 = vpop.f32.mrf.mxu0
    %536 = vmatprep.mubr.f32.mxu0 %v216
    %537 = vmatmul.mubr.f32.gmra.mxu0 %v215
    %v538 = vpop.f32.mrf.mxu0
    %v539 = vadd.f32 0.0, %v538
    %v540 = vpop.f32.mrf.mxu0
    %541 = vmatprep.mubr.f32.mxu0 %v218
    %542 = vmatmul.mubr.f32.gmra.mxu0 %v217
    %v543 = vpop.f32.mrf.mxu0
    %v544 = vadd.f32 0.0, %v543
    %v545 = vpop.f32.mrf.mxu0
    %546 = vmatprep.mubr.f32.mxu0 %v220
    %547 = vmatmul.mubr.f32.gmra.mxu0 %v219
    %v548 = vpop.f32.mrf.mxu0
    %v549 = vadd.f32 0.0, %v548
    %v550 = vpop.f32.mrf.mxu0
    %551 = vmatprep.mubr.f32.mxu0 %v222
    %552 = vmatmul.mubr.f32.gmra.mxu0 %v221
    %v553 = vpop.f32.mrf.mxu0
    %v554 = vadd.f32 0.0, %v553
    %v555 = vpop.f32.mrf.mxu0
    %556 = vmatprep.mubr.f32.mxu0 %v224
    %557 = vmatmul.mubr.f32.gmra.mxu0 %v223
    %v558 = vpop.f32.mrf.mxu0
    %v559 = vadd.f32 0.0, %v558
    %v560 = vpop.f32.mrf.mxu0
    %561 = vmatprep.mubr.f32.mxu0 %v226
    %562 = vmatmul.mubr.f32.gmra.mxu0 %v225
    %v563 = vpop.f32.mrf.mxu0
    %v564 = vadd.f32 0.0, %v563
    %v565 = vpop.f32.mrf.mxu0
    %566 = vmatprep.mubr.f32.mxu0 %v228
    %567 = vmatmul.mubr.f32.gmra.mxu0 %v227
    %v568 = vpop.f32.mrf.mxu0
    %v569 = vadd.f32 0.0, %v568
    %v570 = vpop.f32.mrf.mxu0
    %571 = vmatprep.mubr.f32.mxu0 %v230
    %572 = vmatmul.mubr.f32.gmra.mxu0 %v229
    %v573 = vpop.f32.mrf.mxu0
    %v574 = vadd.f32 0.0, %v573
    %v575 = vpop.f32.mrf.mxu0
    %576 = vmatprep.mubr.f32.mxu0 %v232
    %577 = vmatmul.mubr.f32.gmra.mxu0 %v231
    %v578 = vpop.f32.mrf.mxu0
    %v579 = vadd.f32 0.0, %v578
    %v580 = vpop.f32.mrf.mxu0
    %581 = vmatprep.mubr.f32.mxu0 %v234
    %582 = vmatmul.mubr.f32.gmra.mxu0 %v233
    %v583 = vpop.f32.mrf.mxu0
    %v584 = vadd.f32 0.0, %v583
    %v585 = vpop.f32.mrf.mxu0
    %586 = vmatprep.mubr.f32.mxu0 %v236
    %587 = vmatmul.mubr.f32.gmra.mxu0 %v235
    %v588 = vpop.f32.mrf.mxu0
    %v589 = vadd.f32 0.0, %v588
    %v590 = vpop.f32.mrf.mxu0
    %591 = vmatprep.mubr.f32.mxu0 %v238
    %592 = vmatmul.mubr.f32.gmra.mxu0 %v237
    %v593 = vpop.f32.mrf.mxu0
    %v594 = vadd.f32 0.0, %v593
    %v595 = vpop.f32.mrf.mxu0
    %596 = vmatprep.mubr.f32.mxu0 %v240
    %597 = vmatmul.mubr.f32.gmra.mxu0 %v239
    %v598 = vpop.f32.mrf.mxu0
    %v599 = vadd.f32 0.0, %v598
    %v600 = vpop.f32.mrf.mxu0
    %601 = vmatprep.mubr.f32.mxu0 %v242
    %602 = vmatmul.mubr.f32.gmra.mxu0 %v241
    %v603 = vpop.f32.mrf.mxu0
    %v604 = vadd.f32 0.0, %v603
    %v605 = vpop.f32.mrf.mxu0
    %606 = vmatprep.mubr.f32.mxu0 %v244
    %607 = vmatmul.mubr.f32.gmra.mxu0 %v243
    %v608 = vpop.f32.mrf.mxu0
    %v609 = vadd.f32 0.0, %v608
    %v610 = vpop.f32.mrf.mxu0
    %611 = vmatprep.mubr.f32.mxu0 %v246
    %612 = vmatmul.mubr.f32.gmra.mxu0 %v245
    %v613 = vpop.f32.mrf.mxu0
    %v614 = vadd.f32 0.0, %v613
    %v615 = vpop.f32.mrf.mxu0
    %616 = vmatprep.mubr.f32.mxu0 %v248
    %617 = vmatmul.mubr.f32.gmra.mxu0 %v247
    %v618 = vpop.f32.mrf.mxu0
    %v619 = vadd.f32 0.0, %v618
    %v620 = vpop.f32.mrf.mxu0
    %621 = vmatprep.mubr.f32.mxu0 %v250
    %622 = vmatmul.mubr.f32.gmra.mxu0 %v249
    %v623 = vpop.f32.mrf.mxu0
    %v624 = vadd.f32 0.0, %v623
    %v625 = vpop.f32.mrf.mxu0
    %626 = vmatprep.mubr.f32.mxu0 %v252
    %627 = vmatmul.mubr.f32.gmra.mxu0 %v251
    %v628 = vpop.f32.mrf.mxu0
    %v629 = vadd.f32 0.0, %v628
    %v630 = vpop.f32.mrf.mxu0
    %631 = vmatprep.mubr.f32.mxu0 %v254
    %632 = vmatmul.mubr.f32.gmra.mxu0 %v253
    %v633 = vpop.f32.mrf.mxu0
    %v634 = vadd.f32 0.0, %v633
    %v635 = vpop.f32.mrf.mxu0
    %636 = vmatprep.mubr.f32.mxu0 %v256
    %637 = vmatmul.mubr.f32.gmra.mxu0 %v255
    %v638 = vpop.f32.mrf.mxu0
    %v639 = vadd.f32 0.0, %v638
    %v640 = vpop.f32.mrf.mxu0
    %641 = vmatprep.mubr.f32.mxu0 %v258
    %642 = vmatmul.mubr.f32.gmra.mxu0 %v257
    %v643 = vpop.f32.mrf.mxu0
    %v644 = vadd.f32 0.0, %v643
    %v645 = vpop.f32.mrf.mxu0
    %646 = vmatprep.mubr.f32.mxu0 %v260
    %647 = vmatmul.mubr.f32.gmra.mxu0 %v259
    %v648 = vpop.f32.mrf.mxu0
    %v649 = vadd.f32 0.0, %v648
    %v650 = vpop.f32.mrf.mxu0
    %651 = vmatprep.mubr.f32.mxu0 %v262
    %652 = vmatmul.mubr.f32.gmra.mxu0 %v261
    %v653 = vpop.f32.mrf.mxu0
    %v654 = vadd.f32 0.0, %v653
    %v655 = vpop.f32.mrf.mxu0
    %656 = vmatprep.mubr.f32.mxu0 %v264
    %657 = vmatmul.mubr.f32.gmra.mxu0 %v263
    %v658 = vpop.f32.mrf.mxu0
    %v659 = vadd.f32 0.0, %v658
    %v660 = vpop.f32.mrf.mxu0
    %661 = vmatprep.mubr.f32.mxu0 %v266
    %662 = vmatmul.mubr.f32.gmra.mxu0 %v265
    %v663 = vpop.f32.mrf.mxu0
    %v664 = vadd.f32 0.0, %v663
    %v665 = vpop.f32.mrf.mxu0
    %666 = vmatprep.mubr.f32.mxu0 %v268
    %667 = vmatmul.mubr.f32.gmra.mxu0 %v267
    %v668 = vpop.f32.mrf.mxu0
    %v669 = vadd.f32 0.0, %v668
    %v670 = vpop.f32.mrf.mxu0
    %671 = vdwg.mxu0
    %672 = vmatprep.subr.mxu0 0.0
    %673 = vmatpush1.msra.mxu0 %v188
    %674 = vmatprep.subr.mxu0 0.0
    %675 = vmatpush1.msra.mxu0 %v187
    %676 = vmatprep.subr.mxu0 0.0
    %677 = vmatpush1.msra.mxu0 %v186
    %678 = vmatprep.subr.mxu0 0.0
    %679 = vmatpush1.msra.mxu0 %v185
    %680 = vmatprep.subr.mxu0 0.0
    %681 = vmatpush1.msra.mxu0 %v184
    %682 = vmatprep.subr.mxu0 0.0
    %683 = vmatpush1.msra.mxu0 %v183
    %684 = vmatprep.subr.mxu0 0.0
    %685 = vmatpush1.msra.mxu0 %v182
    %686 = vmatprep.subr.mxu0 0.0
    %687 = vmatpush1.msra.mxu0 %v181
    %688 = vmatprep.subr.mxu0 0.0
    %689 = vmatpush1.msra.mxu0 %v180
    %690 = vmatprep.subr.mxu0 0.0
    %691 = vmatpush1.msra.mxu0 %v179
    %692 = vmatprep.subr.mxu0 0.0
    %693 = vmatpush1.msra.mxu0 %v178
    %694 = vmatprep.subr.mxu0 0.0
    %695 = vmatpush1.msra.mxu0 %v177
    %696 = vmatprep.subr.mxu0 0.0
    %697 = vmatpush1.msra.mxu0 %v176
    %698 = vmatprep.subr.mxu0 0.0
    %699 = vmatpush1.msra.mxu0 %v175
    %700 = vmatprep.subr.mxu0 0.0
    %701 = vmatpush1.msra.mxu0 %v174
    %702 = vmatprep.subr.mxu0 0.0
    %703 = vmatpush1.msra.mxu0 %v173
    %704 = vmatprep.subr.mxu0 0.0
    %705 = vmatpush2.msra.mxu0 %v204
    %706 = vmatprep.subr.mxu0 0.0
    %707 = vmatpush2.msra.mxu0 %v203
    %708 = vmatprep.subr.mxu0 0.0
    %709 = vmatpush2.msra.mxu0 %v202
    %710 = vmatprep.subr.mxu0 0.0
    %711 = vmatpush2.msra.mxu0 %v201
    %712 = vmatprep.subr.mxu0 0.0
    %713 = vmatpush2.msra.mxu0 %v200
    %714 = vmatprep.subr.mxu0 0.0
    %715 = vmatpush2.msra.mxu0 %v199
    %716 = vmatprep.subr.mxu0 0.0
    %717 = vmatpush2.msra.mxu0 %v198
    %718 = vmatprep.subr.mxu0 0.0
    %719 = vmatpush2.msra.mxu0 %v197
    %720 = vmatprep.subr.mxu0 0.0
    %721 = vmatpush2.msra.mxu0 %v196
    %722 = vmatprep.subr.mxu0 0.0
    %723 = vmatpush2.msra.mxu0 %v195
    %724 = vmatprep.subr.mxu0 0.0
    %725 = vmatpush2.msra.mxu0 %v194
    %726 = vmatprep.subr.mxu0 0.0
    %727 = vmatpush2.msra.mxu0 %v193
    %728 = vmatprep.subr.mxu0 0.0
    %729 = vmatpush2.msra.mxu0 %v192
    %730 = vmatprep.subr.mxu0 0.0
    %731 = vmatpush2.msra.mxu0 %v191
    %732 = vmatprep.subr.mxu0 0.0
    %733 = vmatpush2.msra.mxu0 %v190
    %734 = vmatprep.subr.mxu0 0.0
    %735 = vmatpush2.msra.mxu0 %v189
    %736 = vmatprep.mubr.f32.mxu0 %v270
    %737 = vmatmul.mubr.f32.gmra.mxu0 %v269
    %v738 = vpop.f32.mrf.mxu0
    %v739 = vadd.f32 0.0, %v738
    %v740 = vpop.f32.mrf.mxu0
    %741 = vmatprep.mubr.f32.mxu0 %v272
    %742 = vmatmul.mubr.f32.gmra.mxu0 %v271
    %v743 = vpop.f32.mrf.mxu0
    %v744 = vadd.f32 0.0, %v743
    %v745 = vpop.f32.mrf.mxu0
    %746 = vmatprep.mubr.f32.mxu0 %v274
    %747 = vmatmul.mubr.f32.gmra.mxu0 %v273
    %v748 = vpop.f32.mrf.mxu0
    %v749 = vadd.f32 0.0, %v748
    %v750 = vpop.f32.mrf.mxu0
    %751 = vmatprep.mubr.f32.mxu0 %v276
    %752 = vmatmul.mubr.f32.gmra.mxu0 %v275
    %v753 = vpop.f32.mrf.mxu0
    %v754 = vadd.f32 0.0, %v753
    %v755 = vpop.f32.mrf.mxu0
    %756 = vmatprep.mubr.f32.mxu0 %v278
    %757 = vmatmul.mubr.f32.gmra.mxu0 %v277
    %v758 = vpop.f32.mrf.mxu0
    %v759 = vadd.f32 0.0, %v758
    %v760 = vpop.f32.mrf.mxu0
    %761 = vmatprep.mubr.f32.mxu0 %v280
    %762 = vmatmul.mubr.f32.gmra.mxu0 %v279
    %v763 = vpop.f32.mrf.mxu0
    %v764 = vadd.f32 0.0, %v763
    %v765 = vpop.f32.mrf.mxu0
    %766 = vmatprep.mubr.f32.mxu0 %v282
    %767 = vmatmul.mubr.f32.gmra.mxu0 %v281
    %v768 = vpop.f32.mrf.mxu0
    %v769 = vadd.f32 0.0, %v768
    %v770 = vpop.f32.mrf.mxu0
    %771 = vmatprep.mubr.f32.mxu0 %v284
    %772 = vmatmul.mubr.f32.gmra.mxu0 %v283
    %v773 = vpop.f32.mrf.mxu0
    %v774 = vadd.f32 0.0, %v773
    %v775 = vpop.f32.mrf.mxu0
    %776 = vmatprep.mubr.f32.mxu0 %v286
    %777 = vmatmul.mubr.f32.gmra.mxu0 %v285
    %v778 = vpop.f32.mrf.mxu0
    %v779 = vadd.f32 0.0, %v778
    %v780 = vpop.f32.mrf.mxu0
    %781 = vmatprep.mubr.f32.mxu0 %v288
    %782 = vmatmul.mubr.f32.gmra.mxu0 %v287
    %v783 = vpop.f32.mrf.mxu0
    %v784 = vadd.f32 0.0, %v783
    %v785 = vpop.f32.mrf.mxu0
    %786 = vmatprep.mubr.f32.mxu0 %v290
    %787 = vmatmul.mubr.f32.gmra.mxu0 %v289
    %v788 = vpop.f32.mrf.mxu0
    %v789 = vadd.f32 0.0, %v788
    %v790 = vpop.f32.mrf.mxu0
    %791 = vmatprep.mubr.f32.mxu0 %v292
    %792 = vmatmul.mubr.f32.gmra.mxu0 %v291
    %v793 = vpop.f32.mrf.mxu0
    %v794 = vadd.f32 0.0, %v793
    %v795 = vpop.f32.mrf.mxu0
    %796 = vmatprep.mubr.f32.mxu0 %v294
    %797 = vmatmul.mubr.f32.gmra.mxu0 %v293
    %v798 = vpop.f32.mrf.mxu0
    %v799 = vadd.f32 0.0, %v798
    %v800 = vpop.f32.mrf.mxu0
    %801 = vmatprep.mubr.f32.mxu0 %v296
    %802 = vmatmul.mubr.f32.gmra.mxu0 %v295
    %v803 = vpop.f32.mrf.mxu0
    %v804 = vadd.f32 0.0, %v803
    %v805 = vpop.f32.mrf.mxu0
    %806 = vmatprep.mubr.f32.mxu0 %v298
    %807 = vmatmul.mubr.f32.gmra.mxu0 %v297
    %v808 = vpop.f32.mrf.mxu0
    %v809 = vadd.f32 0.0, %v808
    %v810 = vpop.f32.mrf.mxu0
    %811 = vmatprep.mubr.f32.mxu0 %v300
    %812 = vmatmul.mubr.f32.gmra.mxu0 %v299
    %v813 = vpop.f32.mrf.mxu0
    %v814 = vadd.f32 0.0, %v813
    %v815 = vpop.f32.mrf.mxu0
    %816 = vmatprep.mubr.f32.mxu0 %v302
    %817 = vmatmul.mubr.f32.gmra.mxu0 %v301
    %v818 = vpop.f32.mrf.mxu0
    %v819 = vadd.f32 0.0, %v818
    %v820 = vpop.f32.mrf.mxu0
    %821 = vmatprep.mubr.f32.mxu0 %v304
    %822 = vmatmul.mubr.f32.gmra.mxu0 %v303
    %v823 = vpop.f32.mrf.mxu0
    %v824 = vadd.f32 0.0, %v823
    %v825 = vpop.f32.mrf.mxu0
    %826 = vmatprep.mubr.f32.mxu0 %v306
    %827 = vmatmul.mubr.f32.gmra.mxu0 %v305
    %v828 = vpop.f32.mrf.mxu0
    %v829 = vadd.f32 0.0, %v828
    %v830 = vpop.f32.mrf.mxu0
    %831 = vmatprep.mubr.f32.mxu0 %v308
    %832 = vmatmul.mubr.f32.gmra.mxu0 %v307
    %v833 = vpop.f32.mrf.mxu0
    %v834 = vadd.f32 0.0, %v833
    %v835 = vpop.f32.mrf.mxu0
    %836 = vmatprep.mubr.f32.mxu0 %v310
    %837 = vmatmul.mubr.f32.gmra.mxu0 %v309
    %v838 = vpop.f32.mrf.mxu0
    %v839 = vadd.f32 0.0, %v838
    %v840 = vpop.f32.mrf.mxu0
    %841 = vmatprep.mubr.f32.mxu0 %v312
    %842 = vmatmul.mubr.f32.gmra.mxu0 %v311
    %v843 = vpop.f32.mrf.mxu0
    %v844 = vadd.f32 0.0, %v843
    %v845 = vpop.f32.mrf.mxu0
    %846 = vmatprep.mubr.f32.mxu0 %v314
    %847 = vmatmul.mubr.f32.gmra.mxu0 %v313
    %v848 = vpop.f32.mrf.mxu0
    %v849 = vadd.f32 0.0, %v848
    %v850 = vpop.f32.mrf.mxu0
    %851 = vmatprep.mubr.f32.mxu0 %v316
    %852 = vmatmul.mubr.f32.gmra.mxu0 %v315
    %v853 = vpop.f32.mrf.mxu0
    %v854 = vadd.f32 0.0, %v853
    %v855 = vpop.f32.mrf.mxu0
    %856 = vmatprep.mubr.f32.mxu0 %v318
    %857 = vmatmul.mubr.f32.gmra.mxu0 %v317
    %v858 = vpop.f32.mrf.mxu0
    %v859 = vadd.f32 0.0, %v858
    %v860 = vpop.f32.mrf.mxu0
    %861 = vmatprep.mubr.f32.mxu0 %v320
    %862 = vmatmul.mubr.f32.gmra.mxu0 %v319
    %v863 = vpop.f32.mrf.mxu0
    %v864 = vadd.f32 0.0, %v863
    %v865 = vpop.f32.mrf.mxu0
    %866 = vmatprep.mubr.f32.mxu0 %v322
    %867 = vmatmul.mubr.f32.gmra.mxu0 %v321
    %v868 = vpop.f32.mrf.mxu0
    %v869 = vadd.f32 0.0, %v868
    %v870 = vpop.f32.mrf.mxu0
    %871 = vmatprep.mubr.f32.mxu0 %v324
    %872 = vmatmul.mubr.f32.gmra.mxu0 %v323
    %v873 = vpop.f32.mrf.mxu0
    %v874 = vadd.f32 0.0, %v873
    %v875 = vpop.f32.mrf.mxu0
    %876 = vmatprep.mubr.f32.mxu0 %v326
    %877 = vmatmul.mubr.f32.gmra.mxu0 %v325
    %v878 = vpop.f32.mrf.mxu0
    %v879 = vadd.f32 0.0, %v878
    %v880 = vpop.f32.mrf.mxu0
    %881 = vmatprep.mubr.f32.mxu0 %v328
    %882 = vmatmul.mubr.f32.gmra.mxu0 %v327
    %v883 = vpop.f32.mrf.mxu0
    %v884 = vadd.f32 0.0, %v883
    %v885 = vpop.f32.mrf.mxu0
    %886 = vmatprep.mubr.f32.mxu0 %v330
    %887 = vmatmul.mubr.f32.gmra.mxu0 %v329
    %v888 = vpop.f32.mrf.mxu0
    %v889 = vadd.f32 0.0, %v888
    %v890 = vpop.f32.mrf.mxu0
    %891 = vmatprep.mubr.f32.mxu0 %v332
    %892 = vmatmul.mubr.f32.gmra.mxu0 %v331
    %v893 = vpop.f32.mrf.mxu0
    %v894 = vadd.f32 0.0, %v893
    %v895 = vpop.f32.mrf.mxu0
    %896 = vdwg.mxu0
    %v897 = vmax.f32 %v514, %v739
    %v898 = vmax.f32 %v519, %v744
    %v899 = vmax.f32 %v524, %v749
    %v900 = vmax.f32 %v529, %v754
    %v901 = vmax.f32 %v534, %v759
    %v902 = vmax.f32 %v539, %v764
    %v903 = vmax.f32 %v544, %v769
    %v904 = vmax.f32 %v549, %v774
    %v905 = vmax.f32 %v554, %v779
    %v906 = vmax.f32 %v559, %v784
    %v907 = vmax.f32 %v564, %v789
    %v908 = vmax.f32 %v569, %v794
    %v909 = vmax.f32 %v574, %v799
    %v910 = vmax.f32 %v579, %v804
    %v911 = vmax.f32 %v584, %v809
    %v912 = vmax.f32 %v589, %v814
    %v913 = vmax.f32 %v594, %v819
    %v914 = vmax.f32 %v599, %v824
    %v915 = vmax.f32 %v604, %v829
    %v916 = vmax.f32 %v609, %v834
    %v917 = vmax.f32 %v614, %v839
    %v918 = vmax.f32 %v619, %v844
    %v919 = vmax.f32 %v624, %v849
    %v920 = vmax.f32 %v629, %v854
    %v921 = vmax.f32 %v634, %v859
    %v922 = vmax.f32 %v639, %v864
    %v923 = vmax.f32 %v644, %v869
    %v924 = vmax.f32 %v649, %v874
    %v925 = vmax.f32 %v654, %v879
    %v926 = vmax.f32 %v659, %v884
    %v927 = vmax.f32 %v664, %v889
    %v928 = vmax.f32 %v669, %v894
    %930 = vset.pattern.permute.xlu0 0
    %931 = vperm.xlu0 %930, %v333
    %v932 = vpop.permute.xlu0 %931
    %935 = vset.pattern.permute.xlu0 0
    %936 = vperm.xlu0 %935, %v334
    %v937 = vpop.permute.xlu0 %936
    %940 = vset.pattern.permute.xlu0 0
    %941 = vperm.xlu0 %940, %v335
    %v942 = vpop.permute.xlu0 %941
    %945 = vset.pattern.permute.xlu0 0
    %946 = vperm.xlu0 %945, %v336
    %v947 = vpop.permute.xlu0 %946
    %950 = vset.pattern.permute.xlu0 0
    %951 = vperm.xlu0 %950, %v337
    %v952 = vpop.permute.xlu0 %951
    %955 = vset.pattern.permute.xlu0 0
    %956 = vperm.xlu0 %955, %v338
    %v957 = vpop.permute.xlu0 %956
    %960 = vset.pattern.permute.xlu0 0
    %961 = vperm.xlu0 %960, %v339
    %v962 = vpop.permute.xlu0 %961
    %965 = vset.pattern.permute.xlu0 0
    %966 = vperm.xlu0 %965, %v340
    %v967 = vpop.permute.xlu0 %966
    %970 = vset.pattern.permute.xlu0 0
    %971 = vperm.xlu0 %970, %v341
    %v972 = vpop.permute.xlu0 %971
    %975 = vset.pattern.permute.xlu0 0
    %976 = vperm.xlu0 %975, %v342
    %v977 = vpop.permute.xlu0 %976
    %980 = vset.pattern.permute.xlu0 0
    %981 = vperm.xlu0 %980, %v343
    %v982 = vpop.permute.xlu0 %981
    %985 = vset.pattern.permute.xlu0 0
    %986 = vperm.xlu0 %985, %v344
    %v987 = vpop.permute.xlu0 %986
    %990 = vset.pattern.permute.xlu0 0
    %991 = vperm.xlu0 %990, %v345
    %v992 = vpop.permute.xlu0 %991
    %995 = vset.pattern.permute.xlu0 0
    %996 = vperm.xlu0 %995, %v346
    %v997 = vpop.permute.xlu0 %996
    %1000 = vset.pattern.permute.xlu0 0
    %1001 = vperm.xlu0 %1000, %v347
    %v1002 = vpop.permute.xlu0 %1001
    %1005 = vset.pattern.permute.xlu0 0
    %1006 = vperm.xlu0 %1005, %v348
    %v1007 = vpop.permute.xlu0 %1006
    %1010 = vset.pattern.permute.xlu0 0
    %1011 = vperm.xlu0 %1010, %v349
    %v1012 = vpop.permute.xlu0 %1011
    %1015 = vset.pattern.permute.xlu0 0
    %1016 = vperm.xlu0 %1015, %v350
    %v1017 = vpop.permute.xlu0 %1016
    %1020 = vset.pattern.permute.xlu0 0
    %1021 = vperm.xlu0 %1020, %v351
    %v1022 = vpop.permute.xlu0 %1021
    %1025 = vset.pattern.permute.xlu0 0
    %1026 = vperm.xlu0 %1025, %v352
    %v1027 = vpop.permute.xlu0 %1026
    %1030 = vset.pattern.permute.xlu0 0
    %1031 = vperm.xlu0 %1030, %v353
    %v1032 = vpop.permute.xlu0 %1031
    %1035 = vset.pattern.permute.xlu0 0
    %1036 = vperm.xlu0 %1035, %v354
    %v1037 = vpop.permute.xlu0 %1036
    %1040 = vset.pattern.permute.xlu0 0
    %1041 = vperm.xlu0 %1040, %v355
    %v1042 = vpop.permute.xlu0 %1041
    %1045 = vset.pattern.permute.xlu0 0
    %1046 = vperm.xlu0 %1045, %v356
    %v1047 = vpop.permute.xlu0 %1046
    %1050 = vset.pattern.permute.xlu0 0
    %1051 = vperm.xlu0 %1050, %v357
    %v1052 = vpop.permute.xlu0 %1051
    %1055 = vset.pattern.permute.xlu0 0
    %1056 = vperm.xlu0 %1055, %v358
    %v1057 = vpop.permute.xlu0 %1056
    %1060 = vset.pattern.permute.xlu0 0
    %1061 = vperm.xlu0 %1060, %v359
    %v1062 = vpop.permute.xlu0 %1061
    %1065 = vset.pattern.permute.xlu0 0
    %1066 = vperm.xlu0 %1065, %v360
    %v1067 = vpop.permute.xlu0 %1066
    %1070 = vset.pattern.permute.xlu0 0
    %1071 = vperm.xlu0 %1070, %v361
    %v1072 = vpop.permute.xlu0 %1071
    %1075 = vset.pattern.permute.xlu0 0
    %1076 = vperm.xlu0 %1075, %v362
    %v1077 = vpop.permute.xlu0 %1076
    %1080 = vset.pattern.permute.xlu0 0
    %1081 = vperm.xlu0 %1080, %v363
    %v1082 = vpop.permute.xlu0 %1081
    %1085 = vset.pattern.permute.xlu0 0
    %1086 = vperm.xlu0 %1085, %v364
    %v1087 = vpop.permute.xlu0 %1086
    %v1089 = vadd.f32 %v897, %v932
    %v1090 = vadd.f32 %v898, %v937
    %v1091 = vadd.f32 %v899, %v942
    %v1092 = vadd.f32 %v900, %v947
    %v1093 = vadd.f32 %v901, %v952
    %v1094 = vadd.f32 %v902, %v957
    %v1095 = vadd.f32 %v903, %v962
    %v1096 = vadd.f32 %v904, %v967
    %v1097 = vadd.f32 %v905, %v972
    %v1098 = vadd.f32 %v906, %v977
    %v1099 = vadd.f32 %v907, %v982
    %v1100 = vadd.f32 %v908, %v987
    %v1101 = vadd.f32 %v909, %v992
    %v1102 = vadd.f32 %v910, %v997
    %v1103 = vadd.f32 %v911, %v1002
    %v1104 = vadd.f32 %v912, %v1007
    %v1105 = vadd.f32 %v913, %v1012
    %v1106 = vadd.f32 %v914, %v1017
    %v1107 = vadd.f32 %v915, %v1022
    %v1108 = vadd.f32 %v916, %v1027
    %v1109 = vadd.f32 %v917, %v1032
    %v1110 = vadd.f32 %v918, %v1037
    %v1111 = vadd.f32 %v919, %v1042
    %v1112 = vadd.f32 %v920, %v1047
    %v1113 = vadd.f32 %v921, %v1052
    %v1114 = vadd.f32 %v922, %v1057
    %v1115 = vadd.f32 %v923, %v1062
    %v1116 = vadd.f32 %v924, %v1067
    %v1117 = vadd.f32 %v925, %v1072
    %v1118 = vadd.f32 %v926, %v1077
    %v1119 = vadd.f32 %v927, %v1082
    %v1120 = vadd.f32 %v928, %v1087
    %v1121 = vmax.f32 %v1089, 0.0
    %v1122 = vmax.f32 %v1090, 0.0
    %v1123 = vmax.f32 %v1091, 0.0
    %v1124 = vmax.f32 %v1092, 0.0
    %v1125 = vmax.f32 %v1093, 0.0
    %v1126 = vmax.f32 %v1094, 0.0
    %v1127 = vmax.f32 %v1095, 0.0
    %v1128 = vmax.f32 %v1096, 0.0
    %v1129 = vmax.f32 %v1097, 0.0
    %v1130 = vmax.f32 %v1098, 0.0
    %v1131 = vmax.f32 %v1099, 0.0
    %v1132 = vmax.f32 %v1100, 0.0
    %v1133 = vmax.f32 %v1101, 0.0
    %v1134 = vmax.f32 %v1102, 0.0
    %v1135 = vmax.f32 %v1103, 0.0
    %v1136 = vmax.f32 %v1104, 0.0
    %v1137 = vmax.f32 %v1105, 0.0
    %v1138 = vmax.f32 %v1106, 0.0
    %v1139 = vmax.f32 %v1107, 0.0
    %v1140 = vmax.f32 %v1108, 0.0
    %v1141 = vmax.f32 %v1109, 0.0
    %v1142 = vmax.f32 %v1110, 0.0
    %v1143 = vmax.f32 %v1111, 0.0
    %v1144 = vmax.f32 %v1112, 0.0
    %v1145 = vmax.f32 %v1113, 0.0
    %v1146 = vmax.f32 %v1114, 0.0
    %v1147 = vmax.f32 %v1115, 0.0
    %v1148 = vmax.f32 %v1116, 0.0
    %v1149 = vmax.f32 %v1117, 0.0
    %v1150 = vmax.f32 %v1118, 0.0
    %v1151 = vmax.f32 %v1119, 0.0
    %v1152 = vmax.f32 %v1120, 0.0
    %1153 = vmatprep.subr.mxu0 0.0
    %1154 = vmatpush1.msra.mxu0 %v1136
    %1155 = vmatprep.subr.mxu0 0.0
    %1156 = vmatpush1.msra.mxu0 %v1135
    %1157 = vmatprep.subr.mxu0 0.0
    %1158 = vmatpush1.msra.mxu0 %v1134
    %1159 = vmatprep.subr.mxu0 0.0
    %1160 = vmatpush1.msra.mxu0 %v1133
    %1161 = vmatprep.subr.mxu0 0.0
    %1162 = vmatpush1.msra.mxu0 %v1132
    %1163 = vmatprep.subr.mxu0 0.0
    %1164 = vmatpush1.msra.mxu0 %v1131
    %1165 = vmatprep.subr.mxu0 0.0
    %1166 = vmatpush1.msra.mxu0 %v1130
    %1167 = vmatprep.subr.mxu0 0.0
    %1168 = vmatpush1.msra.mxu0 %v1129
    %1169 = vmatprep.subr.mxu0 0.0
    %1170 = vmatpush1.msra.mxu0 %v1128
    %1171 = vmatprep.subr.mxu0 0.0
    %1172 = vmatpush1.msra.mxu0 %v1127
    %1173 = vmatprep.subr.mxu0 0.0
    %1174 = vmatpush1.msra.mxu0 %v1126
    %1175 = vmatprep.subr.mxu0 0.0
    %1176 = vmatpush1.msra.mxu0 %v1125
    %1177 = vmatprep.subr.mxu0 0.0
    %1178 = vmatpush1.msra.mxu0 %v1124
    %1179 = vmatprep.subr.mxu0 0.0
    %1180 = vmatpush1.msra.mxu0 %v1123
    %1181 = vmatprep.subr.mxu0 0.0
    %1182 = vmatpush1.msra.mxu0 %v1122
    %1183 = vmatprep.subr.mxu0 0.0
    %1184 = vmatpush1.msra.mxu0 %v1121
    %1185 = vmatprep.subr.mxu0 0.0
    %1186 = vmatpush2.msra.mxu0 %v1152
    %1187 = vmatprep.subr.mxu0 0.0
    %1188 = vmatpush2.msra.mxu0 %v1151
    %1189 = vmatprep.subr.mxu0 0.0
    %1190 = vmatpush2.msra.mxu0 %v1150
    %1191 = vmatprep.subr.mxu0 0.0
    %1192 = vmatpush2.msra.mxu0 %v1149
    %1193 = vmatprep.subr.mxu0 0.0
    %1194 = vmatpush2.msra.mxu0 %v1148
    %1195 = vmatprep.subr.mxu0 0.0
    %1196 = vmatpush2.msra.mxu0 %v1147
    %1197 = vmatprep.subr.mxu0 0.0
    %1198 = vmatpush2.msra.mxu0 %v1146
    %1199 = vmatprep.subr.mxu0 0.0
    %1200 = vmatpush2.msra.mxu0 %v1145
    %1201 = vmatprep.subr.mxu0 0.0
    %1202 = vmatpush2.msra.mxu0 %v1144
    %1203 = vmatprep.subr.mxu0 0.0
    %1204 = vmatpush2.msra.mxu0 %v1143
    %1205 = vmatprep.subr.mxu0 0.0
    %1206 = vmatpush2.msra.mxu0 %v1142
    %1207 = vmatprep.subr.mxu0 0.0
    %1208 = vmatpush2.msra.mxu0 %v1141
    %1209 = vmatprep.subr.mxu0 0.0
    %1210 = vmatpush2.msra.mxu0 %v1140
    %1211 = vmatprep.subr.mxu0 0.0
    %1212 = vmatpush2.msra.mxu0 %v1139
    %1213 = vmatprep.subr.mxu0 0.0
    %1214 = vmatpush2.msra.mxu0 %v1138
    %1215 = vmatprep.subr.mxu0 0.0
    %1216 = vmatpush2.msra.mxu0 %v1137
    %1217 = vmatprep.mubr.f32.mxu0 %v366
    %1218 = vmatmul.mubr.f32.gmra.mxu0 %v365
    %v1219 = vpop.f32.mrf.mxu0
    %v1220 = vadd.f32 0.0, %v1219
    %v1221 = vpop.f32.mrf.mxu0
    %1222 = vmatprep.mubr.f32.mxu0 %v368
    %1223 = vmatmul.mubr.f32.gmra.mxu0 %v367
    %v1224 = vpop.f32.mrf.mxu0
    %v1225 = vadd.f32 0.0, %v1224
    %v1226 = vpop.f32.mrf.mxu0
    %1227 = vmatprep.mubr.f32.mxu0 %v370
    %1228 = vmatmul.mubr.f32.gmra.mxu0 %v369
    %v1229 = vpop.f32.mrf.mxu0
    %v1230 = vadd.f32 0.0, %v1229
    %v1231 = vpop.f32.mrf.mxu0
    %1232 = vmatprep.mubr.f32.mxu0 %v372
    %1233 = vmatmul.mubr.f32.gmra.mxu0 %v371
    %v1234 = vpop.f32.mrf.mxu0
    %v1235 = vadd.f32 0.0, %v1234
    %v1236 = vpop.f32.mrf.mxu0
    %1237 = vmatprep.mubr.f32.mxu0 %v374
    %1238 = vmatmul.mubr.f32.gmra.mxu0 %v373
    %v1239 = vpop.f32.mrf.mxu0
    %v1240 = vadd.f32 0.0, %v1239
    %v1241 = vpop.f32.mrf.mxu0
    %1242 = vmatprep.mubr.f32.mxu0 %v376
    %1243 = vmatmul.mubr.f32.gmra.mxu0 %v375
    %v1244 = vpop.f32.mrf.mxu0
    %v1245 = vadd.f32 0.0, %v1244
    %v1246 = vpop.f32.mrf.mxu0
    %1247 = vmatprep.mubr.f32.mxu0 %v378
    %1248 = vmatmul.mubr.f32.gmra.mxu0 %v377
    %v1249 = vpop.f32.mrf.mxu0
    %v1250 = vadd.f32 0.0, %v1249
    %v1251 = vpop.f32.mrf.mxu0
    %1252 = vmatprep.mubr.f32.mxu0 %v380
    %1253 = vmatmul.mubr.f32.gmra.mxu0 %v379
    %v1254 = vpop.f32.mrf.mxu0
    %v1255 = vadd.f32 0.0, %v1254
    %v1256 = vpop.f32.mrf.mxu0
    %1257 = vmatprep.mubr.f32.mxu0 %v382
    %1258 = vmatmul.mubr.f32.gmra.mxu0 %v381
    %v1259 = vpop.f32.mrf.mxu0
    %v1260 = vadd.f32 0.0, %v1259
    %v1261 = vpop.f32.mrf.mxu0
    %1262 = vmatprep.mubr.f32.mxu0 %v384
    %1263 = vmatmul.mubr.f32.gmra.mxu0 %v383
    %v1264 = vpop.f32.mrf.mxu0
    %v1265 = vadd.f32 0.0, %v1264
    %v1266 = vpop.f32.mrf.mxu0
    %1267 = vmatprep.mubr.f32.mxu0 %v386
    %1268 = vmatmul.mubr.f32.gmra.mxu0 %v385
    %v1269 = vpop.f32.mrf.mxu0
    %v1270 = vadd.f32 0.0, %v1269
    %v1271 = vpop.f32.mrf.mxu0
    %1272 = vmatprep.mubr.f32.mxu0 %v388
    %1273 = vmatmul.mubr.f32.gmra.mxu0 %v387
    %v1274 = vpop.f32.mrf.mxu0
    %v1275 = vadd.f32 0.0, %v1274
    %v1276 = vpop.f32.mrf.mxu0
    %1277 = vmatprep.mubr.f32.mxu0 %v390
    %1278 = vmatmul.mubr.f32.gmra.mxu0 %v389
    %v1279 = vpop.f32.mrf.mxu0
    %v1280 = vadd.f32 0.0, %v1279
    %v1281 = vpop.f32.mrf.mxu0
    %1282 = vmatprep.mubr.f32.mxu0 %v392
    %1283 = vmatmul.mubr.f32.gmra.mxu0 %v391
    %v1284 = vpop.f32.mrf.mxu0
    %v1285 = vadd.f32 0.0, %v1284
    %v1286 = vpop.f32.mrf.mxu0
    %1287 = vmatprep.mubr.f32.mxu0 %v394
    %1288 = vmatmul.mubr.f32.gmra.mxu0 %v393
    %v1289 = vpop.f32.mrf.mxu0
    %v1290 = vadd.f32 0.0, %v1289
    %v1291 = vpop.f32.mrf.mxu0
    %1292 = vmatprep.mubr.f32.mxu0 %v396
    %1293 = vmatmul.mubr.f32.gmra.mxu0 %v395
    %v1294 = vpop.f32.mrf.mxu0
    %v1295 = vadd.f32 0.0, %v1294
    %v1296 = vpop.f32.mrf.mxu0
    %1297 = vdwg.mxu0
    %1298 = vmatprep.subr.mxu0 0.0
    %1299 = vmatpush1.msra.mxu0 %v1136
    %1300 = vmatprep.subr.mxu0 0.0
    %1301 = vmatpush1.msra.mxu0 %v1135
    %1302 = vmatprep.subr.mxu0 0.0
    %1303 = vmatpush1.msra.mxu0 %v1134
    %1304 = vmatprep.subr.mxu0 0.0
    %1305 = vmatpush1.msra.mxu0 %v1133
    %1306 = vmatprep.subr.mxu0 0.0
    %1307 = vmatpush1.msra.mxu0 %v1132
    %1308 = vmatprep.subr.mxu0 0.0
    %1309 = vmatpush1.msra.mxu0 %v1131
    %1310 = vmatprep.subr.mxu0 0.0
    %1311 = vmatpush1.msra.mxu0 %v1130
    %1312 = vmatprep.subr.mxu0 0.0
    %1313 = vmatpush1.msra.mxu0 %v1129
    %1314 = vmatprep.subr.mxu0 0.0
    %1315 = vmatpush1.msra.mxu0 %v1128
    %1316 = vmatprep.subr.mxu0 0.0
    %1317 = vmatpush1.msra.mxu0 %v1127
    %1318 = vmatprep.subr.mxu0 0.0
    %1319 = vmatpush1.msra.mxu0 %v1126
    %1320 = vmatprep.subr.mxu0 0.0
    %1321 = vmatpush1.msra.mxu0 %v1125
    %1322 = vmatprep.subr.mxu0 0.0
    %1323 = vmatpush1.msra.mxu0 %v1124
    %1324 = vmatprep.subr.mxu0 0.0
    %1325 = vmatpush1.msra.mxu0 %v1123
    %1326 = vmatprep.subr.mxu0 0.0
    %1327 = vmatpush1.msra.mxu0 %v1122
    %1328 = vmatprep.subr.mxu0 0.0
    %1329 = vmatpush1.msra.mxu0 %v1121
    %1330 = vmatprep.subr.mxu0 0.0
    %1331 = vmatpush2.msra.mxu0 %v1152
    %1332 = vmatprep.subr.mxu0 0.0
    %1333 = vmatpush2.msra.mxu0 %v1151
    %1334 = vmatprep.subr.mxu0 0.0
    %1335 = vmatpush2.msra.mxu0 %v1150
    %1336 = vmatprep.subr.mxu0 0.0
    %1337 = vmatpush2.msra.mxu0 %v1149
    %1338 = vmatprep.subr.mxu0 0.0
    %1339 = vmatpush2.msra.mxu0 %v1148
    %1340 = vmatprep.subr.mxu0 0.0
    %1341 = vmatpush2.msra.mxu0 %v1147
    %1342 = vmatprep.subr.mxu0 0.0
    %1343 = vmatpush2.msra.mxu0 %v1146
    %1344 = vmatprep.subr.mxu0 0.0
    %1345 = vmatpush2.msra.mxu0 %v1145
    %1346 = vmatprep.subr.mxu0 0.0
    %1347 = vmatpush2.msra.mxu0 %v1144
    %1348 = vmatprep.subr.mxu0 0.0
    %1349 = vmatpush2.msra.mxu0 %v1143
    %1350 = vmatprep.subr.mxu0 0.0
    %1351 = vmatpush2.msra.mxu0 %v1142
    %1352 = vmatprep.subr.mxu0 0.0
    %1353 = vmatpush2.msra.mxu0 %v1141
    %1354 = vmatprep.subr.mxu0 0.0
    %1355 = vmatpush2.msra.mxu0 %v1140
    %1356 = vmatprep.subr.mxu0 0.0
    %1357 = vmatpush2.msra.mxu0 %v1139
    %1358 = vmatprep.subr.mxu0 0.0
    %1359 = vmatpush2.msra.mxu0 %v1138
    %1360 = vmatprep.subr.mxu0 0.0
    %1361 = vmatpush2.msra.mxu0 %v1137
    %1362 = vmatprep.mubr.f32.mxu0 %v398
    %1363 = vmatmul.mubr.f32.gmra.mxu0 %v397
    %v1364 = vpop.f32.mrf.mxu0
    %v1365 = vadd.f32 0.0, %v1364
    %v1366 = vpop.f32.mrf.mxu0
    %1367 = vmatprep.mubr.f32.mxu0 %v400
    %1368 = vmatmul.mubr.f32.gmra.mxu0 %v399
    %v1369 = vpop.f32.mrf.mxu0
    %v1370 = vadd.f32 0.0, %v1369
    %v1371 = vpop.f32.mrf.mxu0
    %1372 = vmatprep.mubr.f32.mxu0 %v402
    %1373 = vmatmul.mubr.f32.gmra.mxu0 %v401
    %v1374 = vpop.f32.mrf.mxu0
    %v1375 = vadd.f32 0.0, %v1374
    %v1376 = vpop.f32.mrf.mxu0
    %1377 = vmatprep.mubr.f32.mxu0 %v404
    %1378 = vmatmul.mubr.f32.gmra.mxu0 %v403
    %v1379 = vpop.f32.mrf.mxu0
    %v1380 = vadd.f32 0.0, %v1379
    %v1381 = vpop.f32.mrf.mxu0
    %1382 = vmatprep.mubr.f32.mxu0 %v406
    %1383 = vmatmul.mubr.f32.gmra.mxu0 %v405
    %v1384 = vpop.f32.mrf.mxu0
    %v1385 = vadd.f32 0.0, %v1384
    %v1386 = vpop.f32.mrf.mxu0
    %1387 = vmatprep.mubr.f32.mxu0 %v408
    %1388 = vmatmul.mubr.f32.gmra.mxu0 %v407
    %v1389 = vpop.f32.mrf.mxu0
    %v1390 = vadd.f32 0.0, %v1389
    %v1391 = vpop.f32.mrf.mxu0
    %1392 = vmatprep.mubr.f32.mxu0 %v410
    %1393 = vmatmul.mubr.f32.gmra.mxu0 %v409
    %v1394 = vpop.f32.mrf.mxu0
    %v1395 = vadd.f32 0.0, %v1394
    %v1396 = vpop.f32.mrf.mxu0
    %1397 = vmatprep.mubr.f32.mxu0 %v412
    %1398 = vmatmul.mubr.f32.gmra.mxu0 %v411
    %v1399 = vpop.f32.mrf.mxu0
    %v1400 = vadd.f32 0.0, %v1399
    %v1401 = vpop.f32.mrf.mxu0
    %1402 = vmatprep.mubr.f32.mxu0 %v414
    %1403 = vmatmul.mubr.f32.gmra.mxu0 %v413
    %v1404 = vpop.f32.mrf.mxu0
    %v1405 = vadd.f32 0.0, %v1404
    %v1406 = vpop.f32.mrf.mxu0
    %1407 = vmatprep.mubr.f32.mxu0 %v416
    %1408 = vmatmul.mubr.f32.gmra.mxu0 %v415
    %v1409 = vpop.f32.mrf.mxu0
    %v1410 = vadd.f32 0.0, %v1409
    %v1411 = vpop.f32.mrf.mxu0
    %1412 = vmatprep.mubr.f32.mxu0 %v418
    %1413 = vmatmul.mubr.f32.gmra.mxu0 %v417
    %v1414 = vpop.f32.mrf.mxu0
    %v1415 = vadd.f32 0.0, %v1414
    %v1416 = vpop.f32.mrf.mxu0
    %1417 = vmatprep.mubr.f32.mxu0 %v420
    %1418 = vmatmul.mubr.f32.gmra.mxu0 %v419
    %v1419 = vpop.f32.mrf.mxu0
    %v1420 = vadd.f32 0.0, %v1419
    %v1421 = vpop.f32.mrf.mxu0
    %1422 = vmatprep.mubr.f32.mxu0 %v422
    %1423 = vmatmul.mubr.f32.gmra.mxu0 %v421
    %v1424 = vpop.f32.mrf.mxu0
    %v1425 = vadd.f32 0.0, %v1424
    %v1426 = vpop.f32.mrf.mxu0
    %1427 = vmatprep.mubr.f32.mxu0 %v424
    %1428 = vmatmul.mubr.f32.gmra.mxu0 %v423
    %v1429 = vpop.f32.mrf.mxu0
    %v1430 = vadd.f32 0.0, %v1429
    %v1431 = vpop.f32.mrf.mxu0
    %1432 = vmatprep.mubr.f32.mxu0 %v426
    %1433 = vmatmul.mubr.f32.gmra.mxu0 %v425
    %v1434 = vpop.f32.mrf.mxu0
    %v1435 = vadd.f32 0.0, %v1434
    %v1436 = vpop.f32.mrf.mxu0
    %1437 = vmatprep.mubr.f32.mxu0 %v428
    %1438 = vmatmul.mubr.f32.gmra.mxu0 %v427
    %v1439 = vpop.f32.mrf.mxu0
    %v1440 = vadd.f32 0.0, %v1439
    %v1441 = vpop.f32.mrf.mxu0
    %1442 = vdwg.mxu0
    %v1443 = vmax.f32 %v1220, %v1365
    %v1444 = vmax.f32 %v1225, %v1370
    %v1445 = vmax.f32 %v1230, %v1375
    %v1446 = vmax.f32 %v1235, %v1380
    %v1447 = vmax.f32 %v1240, %v1385
    %v1448 = vmax.f32 %v1245, %v1390
    %v1449 = vmax.f32 %v1250, %v1395
    %v1450 = vmax.f32 %v1255, %v1400
    %v1451 = vmax.f32 %v1260, %v1405
    %v1452 = vmax.f32 %v1265, %v1410
    %v1453 = vmax.f32 %v1270, %v1415
    %v1454 = vmax.f32 %v1275, %v1420
    %v1455 = vmax.f32 %v1280, %v1425
    %v1456 = vmax.f32 %v1285, %v1430
    %v1457 = vmax.f32 %v1290, %v1435
    %v1458 = vmax.f32 %v1295, %v1440
    %1460 = vset.pattern.permute.xlu0 0
    %1461 = vperm.xlu0 %1460, %v429
    %v1462 = vpop.permute.xlu0 %1461
    %1465 = vset.pattern.permute.xlu0 0
    %1466 = vperm.xlu0 %1465, %v430
    %v1467 = vpop.permute.xlu0 %1466
    %1470 = vset.pattern.permute.xlu0 0
    %1471 = vperm.xlu0 %1470, %v431
    %v1472 = vpop.permute.xlu0 %1471
    %1475 = vset.pattern.permute.xlu0 0
    %1476 = vperm.xlu0 %1475, %v432
    %v1477 = vpop.permute.xlu0 %1476
    %1480 = vset.pattern.permute.xlu0 0
    %1481 = vperm.xlu0 %1480, %v433
    %v1482 = vpop.permute.xlu0 %1481
    %1485 = vset.pattern.permute.xlu0 0
    %1486 = vperm.xlu0 %1485, %v434
    %v1487 = vpop.permute.xlu0 %1486
    %1490 = vset.pattern.permute.xlu0 0
    %1491 = vperm.xlu0 %1490, %v435
    %v1492 = vpop.permute.xlu0 %1491
    %1495 = vset.pattern.permute.xlu0 0
    %1496 = vperm.xlu0 %1495, %v436
    %v1497 = vpop.permute.xlu0 %1496
    %1500 = vset.pattern.permute.xlu0 0
    %1501 = vperm.xlu0 %1500, %v437
    %v1502 = vpop.permute.xlu0 %1501
    %1505 = vset.pattern.permute.xlu0 0
    %1506 = vperm.xlu0 %1505, %v438
    %v1507 = vpop.permute.xlu0 %1506
    %1510 = vset.pattern.permute.xlu0 0
    %1511 = vperm.xlu0 %1510, %v439
    %v1512 = vpop.permute.xlu0 %1511
    %1515 = vset.pattern.permute.xlu0 0
    %1516 = vperm.xlu0 %1515, %v440
    %v1517 = vpop.permute.xlu0 %1516
    %1520 = vset.pattern.permute.xlu0 0
    %1521 = vperm.xlu0 %1520, %v441
    %v1522 = vpop.permute.xlu0 %1521
    %1525 = vset.pattern.permute.xlu0 0
    %1526 = vperm.xlu0 %1525, %v442
    %v1527 = vpop.permute.xlu0 %1526
    %1530 = vset.pattern.permute.xlu0 0
    %1531 = vperm.xlu0 %1530, %v443
    %v1532 = vpop.permute.xlu0 %1531
    %1535 = vset.pattern.permute.xlu0 0
    %1536 = vperm.xlu0 %1535, %v444
    %v1537 = vpop.permute.xlu0 %1536
    %v1539 = vadd.f32 %v1443, %v1462
    %v1540 = vadd.f32 %v1444, %v1467
    %v1541 = vadd.f32 %v1445, %v1472
    %v1542 = vadd.f32 %v1446, %v1477
    %v1543 = vadd.f32 %v1447, %v1482
    %v1544 = vadd.f32 %v1448, %v1487
    %v1545 = vadd.f32 %v1449, %v1492
    %v1546 = vadd.f32 %v1450, %v1497
    %v1547 = vadd.f32 %v1451, %v1502
    %v1548 = vadd.f32 %v1452, %v1507
    %v1549 = vadd.f32 %v1453, %v1512
    %v1550 = vadd.f32 %v1454, %v1517
    %v1551 = vadd.f32 %v1455, %v1522
    %v1552 = vadd.f32 %v1456, %v1527
    %v1553 = vadd.f32 %v1457, %v1532
    %v1554 = vadd.f32 %v1458, %v1537
    %1556 = vset.pattern.permute.xlu0 0
    %1557 = vperm.xlu0 %1556, %v446
    %v1558 = vpop.permute.xlu0 %1557
    %v1560 = vlaneseq
    %v1561 = vshrl.u32 %v1560, 7
    %v1562 = vsub.s32 0, %v1561
    %v1563 = vrot.slane %v1558, %v1562
    %1564 = vmatprep.subr.mxu0 0.0
    %1565 = vmatpush1.msra.mxu0 %v1554
    %1566 = vmatprep.subr.mxu0 0.0
    %1567 = vmatpush1.msra.mxu0 %v1553
    %1568 = vmatprep.subr.mxu0 0.0
    %1569 = vmatpush1.msra.mxu0 %v1552
    %1570 = vmatprep.subr.mxu0 0.0
    %1571 = vmatpush1.msra.mxu0 %v1551
    %1572 = vmatprep.subr.mxu0 0.0
    %1573 = vmatpush1.msra.mxu0 %v1550
    %1574 = vmatprep.subr.mxu0 0.0
    %1575 = vmatpush1.msra.mxu0 %v1549
    %1576 = vmatprep.subr.mxu0 0.0
    %1577 = vmatpush1.msra.mxu0 %v1548
    %1578 = vmatprep.subr.mxu0 0.0
    %1579 = vmatpush1.msra.mxu0 %v1547
    %1580 = vmatprep.subr.mxu0 0.0
    %1581 = vmatpush1.msra.mxu0 %v1546
    %1582 = vmatprep.subr.mxu0 0.0
    %1583 = vmatpush1.msra.mxu0 %v1545
    %1584 = vmatprep.subr.mxu0 0.0
    %1585 = vmatpush1.msra.mxu0 %v1544
    %1586 = vmatprep.subr.mxu0 0.0
    %1587 = vmatpush1.msra.mxu0 %v1543
    %1588 = vmatprep.subr.mxu0 0.0
    %1589 = vmatpush1.msra.mxu0 %v1542
    %1590 = vmatprep.subr.mxu0 0.0
    %1591 = vmatpush1.msra.mxu0 %v1541
    %1592 = vmatprep.subr.mxu0 0.0
    %1593 = vmatpush1.msra.mxu0 %v1540
    %1594 = vmatprep.subr.mxu0 0.0
    %1595 = vmatpush1.msra.mxu0 %v1539
    %1596 = vmatprep.subr.mxu0 0.0
    %1597 = vmatpush2.msra.mxu0 0.0
    %1598 = vmatprep.subr.mxu0 0.0
    %1599 = vmatpush2.msra.mxu0 0.0
    %1600 = vmatprep.subr.mxu0 0.0
    %1601 = vmatpush2.msra.mxu0 0.0
    %1602 = vmatprep.subr.mxu0 0.0
    %1603 = vmatpush2.msra.mxu0 0.0
    %1604 = vmatprep.subr.mxu0 0.0
    %1605 = vmatpush2.msra.mxu0 0.0
    %1606 = vmatprep.subr.mxu0 0.0
    %1607 = vmatpush2.msra.mxu0 0.0
    %1608 = vmatprep.subr.mxu0 0.0
    %1609 = vmatpush2.msra.mxu0 0.0
    %1610 = vmatprep.subr.mxu0 0.0
    %1611 = vmatpush2.msra.mxu0 0.0
    %1612 = vmatprep.subr.mxu0 0.0
    %1613 = vmatpush2.msra.mxu0 0.0
    %1614 = vmatprep.subr.mxu0 0.0
    %1615 = vmatpush2.msra.mxu0 0.0
    %1616 = vmatprep.subr.mxu0 0.0
    %1617 = vmatpush2.msra.mxu0 0.0
    %1618 = vmatprep.subr.mxu0 0.0
    %1619 = vmatpush2.msra.mxu0 0.0
    %1620 = vmatprep.subr.mxu0 0.0
    %1621 = vmatpush2.msra.mxu0 0.0
    %1622 = vmatprep.subr.mxu0 0.0
    %1623 = vmatpush2.msra.mxu0 0.0
    %1624 = vmatprep.subr.mxu0 0.0
    %1625 = vmatpush2.msra.mxu0 0.0
    %1626 = vmatprep.subr.mxu0 0.0
    %1627 = vmatpush2.msra.mxu0 0.0
    %1628 = vmatprep.mubr.f32.mxu0 0.0
    %1629 = vmatmul.mubr.f32.gmra.mxu0 %v445
    %v1630 = vpop.f32.mrf.mxu0
    %v1631 = vadd.f32 %v1563, %v1630
    %v1632 = vpop.f32.mrf.mxu0
    %1633 = vdwg.mxu0
    %v1634 = vld [vmem:[#allocation7] sm:$0xff]
    %v1635 = vld [vmem:[#allocation7 + $0x8] sm:$0xff]
    %v1636 = vld [vmem:[#allocation7 + $0x10] sm:$0xff]
    %v1637 = vld [vmem:[#allocation7 + $0x18] sm:$0xff]
    %v1638 = vld [vmem:[#allocation7 + $0x20] sm:$0xff]
    %v1639 = vld [vmem:[#allocation7 + $0x28] sm:$0xff]
    %v1640 = vld [vmem:[#allocation7 + $0x30] sm:$0xff]
    %v1641 = vld [vmem:[#allocation7 + $0x38] sm:$0xff]
    %v1642 = vld [vmem:[#allocation7 + $0x40] sm:$0xff]
    %v1643 = vld [vmem:[#allocation7 + $0x48] sm:$0xff]
    %v1644 = vld [vmem:[#allocation7 + $0x50] sm:$0xff]
    %v1645 = vld [vmem:[#allocation7 + $0x58] sm:$0xff]
    %v1646 = vld [vmem:[#allocation7 + $0x60] sm:$0xff]
    %v1647 = vld [vmem:[#allocation7 + $0x68] sm:$0xff]
    %v1648 = vld [vmem:[#allocation7 + $0x70] sm:$0xff]
    %v1649 = vld [vmem:[#allocation7 + $0x78] sm:$0xff]
    %v1650 = vld [vmem:[#allocation13] sm:$0xff]
    %v1651 = vld [vmem:[#allocation13 + $0x8] sm:$0xff]
    %v1652 = vld [vmem:[#allocation13 + $0x10] sm:$0xff]
    %v1653 = vld [vmem:[#allocation13 + $0x18] sm:$0xff]
    %v1654 = vld [vmem:[#allocation13 + $0x20] sm:$0xff]
    %v1655 = vld [vmem:[#allocation13 + $0x28] sm:$0xff]
    %v1656 = vld [vmem:[#allocation13 + $0x30] sm:$0xff]
    %v1657 = vld [vmem:[#allocation13 + $0x38] sm:$0xff]
    %v1658 = vld [vmem:[#allocation13 + $0x40] sm:$0xff]
    %v1659 = vld [vmem:[#allocation13 + $0x48] sm:$0xff]
    %v1660 = vld [vmem:[#allocation13 + $0x50] sm:$0xff]
    %v1661 = vld [vmem:[#allocation13 + $0x58] sm:$0xff]
    %v1662 = vld [vmem:[#allocation13 + $0x60] sm:$0xff]
    %v1663 = vld [vmem:[#allocation13 + $0x68] sm:$0xff]
    %v1664 = vld [vmem:[#allocation13 + $0x70] sm:$0xff]
    %v1665 = vld [vmem:[#allocation13 + $0x78] sm:$0xff]
    %v1666 = vld [vmem:[#allocation15] sm:$0xff]
    %v1667 = vld [vmem:[#allocation15 + $0x8] sm:$0xff]
    %v1668 = vld [vmem:[#allocation15 + $0x10] sm:$0xff]
    %v1669 = vld [vmem:[#allocation15 + $0x18] sm:$0xff]
    %v1670 = vld [vmem:[#allocation15 + $0x20] sm:$0xff]
    %v1671 = vld [vmem:[#allocation15 + $0x28] sm:$0xff]
    %v1672 = vld [vmem:[#allocation15 + $0x30] sm:$0xff]
    %v1673 = vld [vmem:[#allocation15 + $0x38] sm:$0xff]
    %v1674 = vld [vmem:[#allocation15 + $0x40] sm:$0xff]
    %v1675 = vld [vmem:[#allocation15 + $0x48] sm:$0xff]
    %v1676 = vld [vmem:[#allocation15 + $0x50] sm:$0xff]
    %v1677 = vld [vmem:[#allocation15 + $0x58] sm:$0xff]
    %v1678 = vld [vmem:[#allocation15 + $0x60] sm:$0xff]
    %v1679 = vld [vmem:[#allocation15 + $0x68] sm:$0xff]
    %v1680 = vld [vmem:[#allocation15 + $0x70] sm:$0xff]
    %v1681 = vld [vmem:[#allocation15 + $0x78] sm:$0xff]
    %v1682 = vld [vmem:[%s12] sm:$0xff]
    %v1683 = vld [vmem:[%s12 + $0x8] sm:$0xff]
    %v1684 = vld [vmem:[%s12 + $0x10] sm:$0xff]
    %v1685 = vld [vmem:[%s12 + $0x18] sm:$0xff]
    %v1686 = vld [vmem:[%s12 + $0x20] sm:$0xff]
    %v1687 = vld [vmem:[%s12 + $0x28] sm:$0xff]
    %v1688 = vld [vmem:[%s12 + $0x30] sm:$0xff]
    %v1689 = vld [vmem:[%s12 + $0x38] sm:$0xff]
    %v1690 = vld [vmem:[%s12 + $0x40] sm:$0xff]
    %v1691 = vld [vmem:[%s12 + $0x48] sm:$0xff]
    %v1692 = vld [vmem:[%s12 + $0x50] sm:$0xff]
    %v1693 = vld [vmem:[%s12 + $0x58] sm:$0xff]
    %v1694 = vld [vmem:[%s12 + $0x60] sm:$0xff]
    %v1695 = vld [vmem:[%s12 + $0x68] sm:$0xff]
    %v1696 = vld [vmem:[%s12 + $0x70] sm:$0xff]
    %v1697 = vld [vmem:[%s12 + $0x78] sm:$0xff]
    %v1698 = vld [vmem:[%s13] sm:$0xff]
    %v1699 = vld [vmem:[%s13 + $0x8] sm:$0xff]
    %v1700 = vld [vmem:[%s13 + $0x10] sm:$0xff]
    %v1701 = vld [vmem:[%s13 + $0x18] sm:$0xff]
    %v1702 = vld [vmem:[%s13 + $0x20] sm:$0xff]
    %v1703 = vld [vmem:[%s13 + $0x28] sm:$0xff]
    %v1704 = vld [vmem:[%s13 + $0x30] sm:$0xff]
    %v1705 = vld [vmem:[%s13 + $0x38] sm:$0xff]
    %v1706 = vld [vmem:[#allocation16] sm:$0xff]
    %v1707 = vld [vmem:[#allocation16 + $0x8] sm:$0xff]
    %v1708 = vld [vmem:[#allocation16 + $0x10] sm:$0xff]
    %v1709 = vld [vmem:[#allocation16 + $0x18] sm:$0xff]
    %v1710 = vld [vmem:[#allocation16 + $0x20] sm:$0xff]
    %v1711 = vld [vmem:[#allocation16 + $0x28] sm:$0xff]
    %v1712 = vld [vmem:[#allocation16 + $0x30] sm:$0xff]
    %v1713 = vld [vmem:[#allocation16 + $0x38] sm:$0xff]
    %v1714 = vld [vmem:[%s15] sm:$0xff]
    %v1715 = vld [vmem:[%s15 + $0x8] sm:$0xff]
    %v1716 = vld [vmem:[%s15 + $0x10] sm:$0xff]
    %v1717 = vld [vmem:[%s15 + $0x18] sm:$0xff]
    %v1718 = vld [vmem:[%s15 + $0x20] sm:$0xff]
    %v1719 = vld [vmem:[%s15 + $0x28] sm:$0xff]
    %v1720 = vld [vmem:[%s15 + $0x30] sm:$0xff]
    %v1721 = vld [vmem:[%s15 + $0x38] sm:$0xff]
    %v1722 = vld [vmem:[%s16] sm:$0x1]
    %v1723 = vld [vmem:[#allocation3] sm:$0x1]
    %1724 = vmatprep.subr.mxu0 0.0
    %1725 = vmatpush1.msra.mxu0 %v1649
    %1726 = vmatprep.subr.mxu0 0.0
    %1727 = vmatpush1.msra.mxu0 %v1648
    %1728 = vmatprep.subr.mxu0 0.0
    %1729 = vmatpush1.msra.mxu0 %v1647
    %1730 = vmatprep.subr.mxu0 0.0
    %1731 = vmatpush1.msra.mxu0 %v1646
    %1732 = vmatprep.subr.mxu0 0.0
    %1733 = vmatpush1.msra.mxu0 %v1645
    %1734 = vmatprep.subr.mxu0 0.0
    %1735 = vmatpush1.msra.mxu0 %v1644
    %1736 = vmatprep.subr.mxu0 0.0
    %1737 = vmatpush1.msra.mxu0 %v1643
    %1738 = vmatprep.subr.mxu0 0.0
    %1739 = vmatpush1.msra.mxu0 %v1642
    %1740 = vmatprep.subr.mxu0 0.0
    %1741 = vmatpush1.msra.mxu0 %v1641
    %1742 = vmatprep.subr.mxu0 0.0
    %1743 = vmatpush1.msra.mxu0 %v1640
    %1744 = vmatprep.subr.mxu0 0.0
    %1745 = vmatpush1.msra.mxu0 %v1639
    %1746 = vmatprep.subr.mxu0 0.0
    %1747 = vmatpush1.msra.mxu0 %v1638
    %1748 = vmatprep.subr.mxu0 0.0
    %1749 = vmatpush1.msra.mxu0 %v1637
    %1750 = vmatprep.subr.mxu0 0.0
    %1751 = vmatpush1.msra.mxu0 %v1636
    %1752 = vmatprep.subr.mxu0 0.0
    %1753 = vmatpush1.msra.mxu0 %v1635
    %1754 = vmatprep.subr.mxu0 0.0
    %1755 = vmatpush1.msra.mxu0 %v1634
    %1756 = vmatprep.subr.mxu0 0.0
    %1757 = vmatpush2.msra.mxu0 0.0
    %1758 = vmatprep.subr.mxu0 0.0
    %1759 = vmatpush2.msra.mxu0 0.0
    %1760 = vmatprep.subr.mxu0 0.0
    %1761 = vmatpush2.msra.mxu0 0.0
    %1762 = vmatprep.subr.mxu0 0.0
    %1763 = vmatpush2.msra.mxu0 0.0
    %1764 = vmatprep.subr.mxu0 0.0
    %1765 = vmatpush2.msra.mxu0 0.0
    %1766 = vmatprep.subr.mxu0 0.0
    %1767 = vmatpush2.msra.mxu0 0.0
    %1768 = vmatprep.subr.mxu0 0.0
    %1769 = vmatpush2.msra.mxu0 0.0
    %1770 = vmatprep.subr.mxu0 0.0
    %1771 = vmatpush2.msra.mxu0 0.0
    %1772 = vmatprep.subr.mxu0 0.0
    %1773 = vmatpush2.msra.mxu0 0.0
    %1774 = vmatprep.subr.mxu0 0.0
    %1775 = vmatpush2.msra.mxu0 0.0
    %1776 = vmatprep.subr.mxu0 0.0
    %1777 = vmatpush2.msra.mxu0 0.0
    %1778 = vmatprep.subr.mxu0 0.0
    %1779 = vmatpush2.msra.mxu0 0.0
    %1780 = vmatprep.subr.mxu0 0.0
    %1781 = vmatpush2.msra.mxu0 0.0
    %1782 = vmatprep.subr.mxu0 0.0
    %1783 = vmatpush2.msra.mxu0 0.0
    %1784 = vmatprep.subr.mxu0 0.0
    %1785 = vmatpush2.msra.mxu0 0.0
    %1786 = vmatprep.subr.mxu0 0.0
    %1787 = vmatpush2.msra.mxu0 0.0
    %1788 = vmatprep.mubr.f32.mxu0 0.0
    %1789 = vmatmul.mubr.f32.gmra.mxu0 %v1650
    %v1790 = vpop.f32.mrf.mxu0
    %v1791 = vadd.f32 0.0, %v1790
    %v1792 = vpop.f32.mrf.mxu0
    %1793 = vmatprep.mubr.f32.mxu0 0.0
    %1794 = vmatmul.mubr.f32.gmra.mxu0 %v1651
    %v1795 = vpop.f32.mrf.mxu0
    %v1796 = vadd.f32 0.0, %v1795
    %v1797 = vpop.f32.mrf.mxu0
    %1798 = vmatprep.mubr.f32.mxu0 0.0
    %1799 = vmatmul.mubr.f32.gmra.mxu0 %v1652
    %v1800 = vpop.f32.mrf.mxu0
    %v1801 = vadd.f32 0.0, %v1800
    %v1802 = vpop.f32.mrf.mxu0
    %1803 = vmatprep.mubr.f32.mxu0 0.0
    %1804 = vmatmul.mubr.f32.gmra.mxu0 %v1653
    %v1805 = vpop.f32.mrf.mxu0
    %v1806 = vadd.f32 0.0, %v1805
    %v1807 = vpop.f32.mrf.mxu0
    %1808 = vmatprep.mubr.f32.mxu0 0.0
    %1809 = vmatmul.mubr.f32.gmra.mxu0 %v1654
    %v1810 = vpop.f32.mrf.mxu0
    %v1811 = vadd.f32 0.0, %v1810
    %v1812 = vpop.f32.mrf.mxu0
    %1813 = vmatprep.mubr.f32.mxu0 0.0
    %1814 = vmatmul.mubr.f32.gmra.mxu0 %v1655
    %v1815 = vpop.f32.mrf.mxu0
    %v1816 = vadd.f32 0.0, %v1815
    %v1817 = vpop.f32.mrf.mxu0
    %1818 = vmatprep.mubr.f32.mxu0 0.0
    %1819 = vmatmul.mubr.f32.gmra.mxu0 %v1656
    %v1820 = vpop.f32.mrf.mxu0
    %v1821 = vadd.f32 0.0, %v1820
    %v1822 = vpop.f32.mrf.mxu0
    %1823 = vmatprep.mubr.f32.mxu0 0.0
    %1824 = vmatmul.mubr.f32.gmra.mxu0 %v1657
    %v1825 = vpop.f32.mrf.mxu0
    %v1826 = vadd.f32 0.0, %v1825
    %v1827 = vpop.f32.mrf.mxu0
    %1828 = vmatprep.mubr.f32.mxu0 0.0
    %1829 = vmatmul.mubr.f32.gmra.mxu0 %v1658
    %v1830 = vpop.f32.mrf.mxu0
    %v1831 = vadd.f32 0.0, %v1830
    %v1832 = vpop.f32.mrf.mxu0
    %1833 = vmatprep.mubr.f32.mxu0 0.0
    %1834 = vmatmul.mubr.f32.gmra.mxu0 %v1659
    %v1835 = vpop.f32.mrf.mxu0
    %v1836 = vadd.f32 0.0, %v1835
    %v1837 = vpop.f32.mrf.mxu0
    %1838 = vmatprep.mubr.f32.mxu0 0.0
    %1839 = vmatmul.mubr.f32.gmra.mxu0 %v1660
    %v1840 = vpop.f32.mrf.mxu0
    %v1841 = vadd.f32 0.0, %v1840
    %v1842 = vpop.f32.mrf.mxu0
    %1843 = vmatprep.mubr.f32.mxu0 0.0
    %1844 = vmatmul.mubr.f32.gmra.mxu0 %v1661
    %v1845 = vpop.f32.mrf.mxu0
    %v1846 = vadd.f32 0.0, %v1845
    %v1847 = vpop.f32.mrf.mxu0
    %1848 = vmatprep.mubr.f32.mxu0 0.0
    %1849 = vmatmul.mubr.f32.gmra.mxu0 %v1662
    %v1850 = vpop.f32.mrf.mxu0
    %v1851 = vadd.f32 0.0, %v1850
    %v1852 = vpop.f32.mrf.mxu0
    %1853 = vmatprep.mubr.f32.mxu0 0.0
    %1854 = vmatmul.mubr.f32.gmra.mxu0 %v1663
    %v1855 = vpop.f32.mrf.mxu0
    %v1856 = vadd.f32 0.0, %v1855
    %v1857 = vpop.f32.mrf.mxu0
    %1858 = vmatprep.mubr.f32.mxu0 0.0
    %1859 = vmatmul.mubr.f32.gmra.mxu0 %v1664
    %v1860 = vpop.f32.mrf.mxu0
    %v1861 = vadd.f32 0.0, %v1860
    %v1862 = vpop.f32.mrf.mxu0
    %1863 = vmatprep.mubr.f32.mxu0 0.0
    %1864 = vmatmul.mubr.f32.gmra.mxu0 %v1665
    %v1865 = vpop.f32.mrf.mxu0
    %v1866 = vadd.f32 0.0, %v1865
    %v1867 = vpop.f32.mrf.mxu0
    %1868 = vdwg.mxu0
    %1869 = vmatprep.subr.mxu0 0.0
    %1870 = vmatpush1.msra.mxu0 %v1649
    %1871 = vmatprep.subr.mxu0 0.0
    %1872 = vmatpush1.msra.mxu0 %v1648
    %1873 = vmatprep.subr.mxu0 0.0
    %1874 = vmatpush1.msra.mxu0 %v1647
    %1875 = vmatprep.subr.mxu0 0.0
    %1876 = vmatpush1.msra.mxu0 %v1646
    %1877 = vmatprep.subr.mxu0 0.0
    %1878 = vmatpush1.msra.mxu0 %v1645
    %1879 = vmatprep.subr.mxu0 0.0
    %1880 = vmatpush1.msra.mxu0 %v1644
    %1881 = vmatprep.subr.mxu0 0.0
    %1882 = vmatpush1.msra.mxu0 %v1643
    %1883 = vmatprep.subr.mxu0 0.0
    %1884 = vmatpush1.msra.mxu0 %v1642
    %1885 = vmatprep.subr.mxu0 0.0
    %1886 = vmatpush1.msra.mxu0 %v1641
    %1887 = vmatprep.subr.mxu0 0.0
    %1888 = vmatpush1.msra.mxu0 %v1640
    %1889 = vmatprep.subr.mxu0 0.0
    %1890 = vmatpush1.msra.mxu0 %v1639
    %1891 = vmatprep.subr.mxu0 0.0
    %1892 = vmatpush1.msra.mxu0 %v1638
    %1893 = vmatprep.subr.mxu0 0.0
    %1894 = vmatpush1.msra.mxu0 %v1637
    %1895 = vmatprep.subr.mxu0 0.0
    %1896 = vmatpush1.msra.mxu0 %v1636
    %1897 = vmatprep.subr.mxu0 0.0
    %1898 = vmatpush1.msra.mxu0 %v1635
    %1899 = vmatprep.subr.mxu0 0.0
    %1900 = vmatpush1.msra.mxu0 %v1634
    %1901 = vmatprep.subr.mxu0 0.0
    %1902 = vmatpush2.msra.mxu0 0.0
    %1903 = vmatprep.subr.mxu0 0.0
    %1904 = vmatpush2.msra.mxu0 0.0
    %1905 = vmatprep.subr.mxu0 0.0
    %1906 = vmatpush2.msra.mxu0 0.0
    %1907 = vmatprep.subr.mxu0 0.0
    %1908 = vmatpush2.msra.mxu0 0.0
    %1909 = vmatprep.subr.mxu0 0.0
    %1910 = vmatpush2.msra.mxu0 0.0
    %1911 = vmatprep.subr.mxu0 0.0
    %1912 = vmatpush2.msra.mxu0 0.0
    %1913 = vmatprep.subr.mxu0 0.0
    %1914 = vmatpush2.msra.mxu0 0.0
    %1915 = vmatprep.subr.mxu0 0.0
    %1916 = vmatpush2.msra.mxu0 0.0
    %1917 = vmatprep.subr.mxu0 0.0
    %1918 = vmatpush2.msra.mxu0 0.0
    %1919 = vmatprep.subr.mxu0 0.0
    %1920 = vmatpush2.msra.mxu0 0.0
    %1921 = vmatprep.subr.mxu0 0.0
    %1922 = vmatpush2.msra.mxu0 0.0
    %1923 = vmatprep.subr.mxu0 0.0
    %1924 = vmatpush2.msra.mxu0 0.0
    %1925 = vmatprep.subr.mxu0 0.0
    %1926 = vmatpush2.msra.mxu0 0.0
    %1927 = vmatprep.subr.mxu0 0.0
    %1928 = vmatpush2.msra.mxu0 0.0
    %1929 = vmatprep.subr.mxu0 0.0
    %1930 = vmatpush2.msra.mxu0 0.0
    %1931 = vmatprep.subr.mxu0 0.0
    %1932 = vmatpush2.msra.mxu0 0.0
    %1933 = vmatprep.mubr.f32.mxu0 0.0
    %1934 = vmatmul.mubr.f32.gmra.mxu0 %v1666
    %v1935 = vpop.f32.mrf.mxu0
    %v1936 = vadd.f32 0.0, %v1935
    %v1937 = vpop.f32.mrf.mxu0
    %1938 = vmatprep.mubr.f32.mxu0 0.0
    %1939 = vmatmul.mubr.f32.gmra.mxu0 %v1667
    %v1940 = vpop.f32.mrf.mxu0
    %v1941 = vadd.f32 0.0, %v1940
    %v1942 = vpop.f32.mrf.mxu0
    %1943 = vmatprep.mubr.f32.mxu0 0.0
    %1944 = vmatmul.mubr.f32.gmra.mxu0 %v1668
    %v1945 = vpop.f32.mrf.mxu0
    %v1946 = vadd.f32 0.0, %v1945
    %v1947 = vpop.f32.mrf.mxu0
    %1948 = vmatprep.mubr.f32.mxu0 0.0
    %1949 = vmatmul.mubr.f32.gmra.mxu0 %v1669
    %v1950 = vpop.f32.mrf.mxu0
    %v1951 = vadd.f32 0.0, %v1950
    %v1952 = vpop.f32.mrf.mxu0
    %1953 = vmatprep.mubr.f32.mxu0 0.0
    %1954 = vmatmul.mubr.f32.gmra.mxu0 %v1670
    %v1955 = vpop.f32.mrf.mxu0
    %v1956 = vadd.f32 0.0, %v1955
    %v1957 = vpop.f32.mrf.mxu0
    %1958 = vmatprep.mubr.f32.mxu0 0.0
    %1959 = vmatmul.mubr.f32.gmra.mxu0 %v1671
    %v1960 = vpop.f32.mrf.mxu0
    %v1961 = vadd.f32 0.0, %v1960
    %v1962 = vpop.f32.mrf.mxu0
    %1963 = vmatprep.mubr.f32.mxu0 0.0
    %1964 = vmatmul.mubr.f32.gmra.mxu0 %v1672
    %v1965 = vpop.f32.mrf.mxu0
    %v1966 = vadd.f32 0.0, %v1965
    %v1967 = vpop.f32.mrf.mxu0
    %1968 = vmatprep.mubr.f32.mxu0 0.0
    %1969 = vmatmul.mubr.f32.gmra.mxu0 %v1673
    %v1970 = vpop.f32.mrf.mxu0
    %v1971 = vadd.f32 0.0, %v1970
    %v1972 = vpop.f32.mrf.mxu0
    %1973 = vmatprep.mubr.f32.mxu0 0.0
    %1974 = vmatmul.mubr.f32.gmra.mxu0 %v1674
    %v1975 = vpop.f32.mrf.mxu0
    %v1976 = vadd.f32 0.0, %v1975
    %v1977 = vpop.f32.mrf.mxu0
    %1978 = vmatprep.mubr.f32.mxu0 0.0
    %1979 = vmatmul.mubr.f32.gmra.mxu0 %v1675
    %v1980 = vpop.f32.mrf.mxu0
    %v1981 = vadd.f32 0.0, %v1980
    %v1982 = vpop.f32.mrf.mxu0
    %1983 = vmatprep.mubr.f32.mxu0 0.0
    %1984 = vmatmul.mubr.f32.gmra.mxu0 %v1676
    %v1985 = vpop.f32.mrf.mxu0
    %v1986 = vadd.f32 0.0, %v1985
    %v1987 = vpop.f32.mrf.mxu0
    %1988 = vmatprep.mubr.f32.mxu0 0.0
    %1989 = vmatmul.mubr.f32.gmra.mxu0 %v1677
    %v1990 = vpop.f32.mrf.mxu0
    %v1991 = vadd.f32 0.0, %v1990
    %v1992 = vpop.f32.mrf.mxu0
    %1993 = vmatprep.mubr.f32.mxu0 0.0
    %1994 = vmatmul.mubr.f32.gmra.mxu0 %v1678
    %v1995 = vpop.f32.mrf.mxu0
    %v1996 = vadd.f32 0.0, %v1995
    %v1997 = vpop.f32.mrf.mxu0
    %1998 = vmatprep.mubr.f32.mxu0 0.0
    %1999 = vmatmul.mubr.f32.gmra.mxu0 %v1679
    %v2000 = vpop.f32.mrf.mxu0
    %v2001 = vadd.f32 0.0, %v2000
    %v2002 = vpop.f32.mrf.mxu0
    %2003 = vmatprep.mubr.f32.mxu0 0.0
    %2004 = vmatmul.mubr.f32.gmra.mxu0 %v1680
    %v2005 = vpop.f32.mrf.mxu0
    %v2006 = vadd.f32 0.0, %v2005
    %v2007 = vpop.f32.mrf.mxu0
    %2008 = vmatprep.mubr.f32.mxu0 0.0
    %2009 = vmatmul.mubr.f32.gmra.mxu0 %v1681
    %v2010 = vpop.f32.mrf.mxu0
    %v2011 = vadd.f32 0.0, %v2010
    %v2012 = vpop.f32.mrf.mxu0
    %2013 = vdwg.mxu0
    %v2014 = vmax.f32 %v1791, %v1936
    %v2015 = vmax.f32 %v1796, %v1941
    %v2016 = vmax.f32 %v1801, %v1946
    %v2017 = vmax.f32 %v1806, %v1951
    %v2018 = vmax.f32 %v1811, %v1956
    %v2019 = vmax.f32 %v1816, %v1961
    %v2020 = vmax.f32 %v1821, %v1966
    %v2021 = vmax.f32 %v1826, %v1971
    %v2022 = vmax.f32 %v1831, %v1976
    %v2023 = vmax.f32 %v1836, %v1981
    %v2024 = vmax.f32 %v1841, %v1986
    %v2025 = vmax.f32 %v1846, %v1991
    %v2026 = vmax.f32 %v1851, %v1996
    %v2027 = vmax.f32 %v1856, %v2001
    %v2028 = vmax.f32 %v1861, %v2006
    %v2029 = vmax.f32 %v1866, %v2011
    %2031 = vset.pattern.permute.xlu0 0
    %2032 = vperm.xlu0 %2031, %v1682
    %v2033 = vpop.permute.xlu0 %2032
    %2036 = vset.pattern.permute.xlu0 0
    %2037 = vperm.xlu0 %2036, %v1683
    %v2038 = vpop.permute.xlu0 %2037
    %2041 = vset.pattern.permute.xlu0 0
    %2042 = vperm.xlu0 %2041, %v1684
    %v2043 = vpop.permute.xlu0 %2042
    %2046 = vset.pattern.permute.xlu0 0
    %2047 = vperm.xlu0 %2046, %v1685
    %v2048 = vpop.permute.xlu0 %2047
    %2051 = vset.pattern.permute.xlu0 0
    %2052 = vperm.xlu0 %2051, %v1686
    %v2053 = vpop.permute.xlu0 %2052
    %2056 = vset.pattern.permute.xlu0 0
    %2057 = vperm.xlu0 %2056, %v1687
    %v2058 = vpop.permute.xlu0 %2057
    %2061 = vset.pattern.permute.xlu0 0
    %2062 = vperm.xlu0 %2061, %v1688
    %v2063 = vpop.permute.xlu0 %2062
    %2066 = vset.pattern.permute.xlu0 0
    %2067 = vperm.xlu0 %2066, %v1689
    %v2068 = vpop.permute.xlu0 %2067
    %2071 = vset.pattern.permute.xlu0 0
    %2072 = vperm.xlu0 %2071, %v1690
    %v2073 = vpop.permute.xlu0 %2072
    %2076 = vset.pattern.permute.xlu0 0
    %2077 = vperm.xlu0 %2076, %v1691
    %v2078 = vpop.permute.xlu0 %2077
    %2081 = vset.pattern.permute.xlu0 0
    %2082 = vperm.xlu0 %2081, %v1692
    %v2083 = vpop.permute.xlu0 %2082
    %2086 = vset.pattern.permute.xlu0 0
    %2087 = vperm.xlu0 %2086, %v1693
    %v2088 = vpop.permute.xlu0 %2087
    %2091 = vset.pattern.permute.xlu0 0
    %2092 = vperm.xlu0 %2091, %v1694
    %v2093 = vpop.permute.xlu0 %2092
    %2096 = vset.pattern.permute.xlu0 0
    %2097 = vperm.xlu0 %2096, %v1695
    %v2098 = vpop.permute.xlu0 %2097
    %2101 = vset.pattern.permute.xlu0 0
    %2102 = vperm.xlu0 %2101, %v1696
    %v2103 = vpop.permute.xlu0 %2102
    %2106 = vset.pattern.permute.xlu0 0
    %2107 = vperm.xlu0 %2106, %v1697
    %v2108 = vpop.permute.xlu0 %2107
    %v2110 = vadd.f32 %v2014, %v2033
    %v2111 = vadd.f32 %v2015, %v2038
    %v2112 = vadd.f32 %v2016, %v2043
    %v2113 = vadd.f32 %v2017, %v2048
    %v2114 = vadd.f32 %v2018, %v2053
    %v2115 = vadd.f32 %v2019, %v2058
    %v2116 = vadd.f32 %v2020, %v2063
    %v2117 = vadd.f32 %v2021, %v2068
    %v2118 = vadd.f32 %v2022, %v2073
    %v2119 = vadd.f32 %v2023, %v2078
    %v2120 = vadd.f32 %v2024, %v2083
    %v2121 = vadd.f32 %v2025, %v2088
    %v2122 = vadd.f32 %v2026, %v2093
    %v2123 = vadd.f32 %v2027, %v2098
    %v2124 = vadd.f32 %v2028, %v2103
    %v2125 = vadd.f32 %v2029, %v2108
    %v2126 = vmax.f32 %v2110, 0.0
    %v2127 = vmax.f32 %v2111, 0.0
    %v2128 = vmax.f32 %v2112, 0.0
    %v2129 = vmax.f32 %v2113, 0.0
    %v2130 = vmax.f32 %v2114, 0.0
    %v2131 = vmax.f32 %v2115, 0.0
    %v2132 = vmax.f32 %v2116, 0.0
    %v2133 = vmax.f32 %v2117, 0.0
    %v2134 = vmax.f32 %v2118, 0.0
    %v2135 = vmax.f32 %v2119, 0.0
    %v2136 = vmax.f32 %v2120, 0.0
    %v2137 = vmax.f32 %v2121, 0.0
    %v2138 = vmax.f32 %v2122, 0.0
    %v2139 = vmax.f32 %v2123, 0.0
    %v2140 = vmax.f32 %v2124, 0.0
    %v2141 = vmax.f32 %v2125, 0.0
    %2142 = vmatprep.subr.mxu0 0.0
    %2143 = vmatpush1.msra.mxu0 %v2141
    %2144 = vmatprep.subr.mxu0 0.0
    %2145 = vmatpush1.msra.mxu0 %v2140
    %2146 = vmatprep.subr.mxu0 0.0
    %2147 = vmatpush1.msra.mxu0 %v2139
    %2148 = vmatprep.subr.mxu0 0.0
    %2149 = vmatpush1.msra.mxu0 %v2138
    %2150 = vmatprep.subr.mxu0 0.0
    %2151 = vmatpush1.msra.mxu0 %v2137
    %2152 = vmatprep.subr.mxu0 0.0
    %2153 = vmatpush1.msra.mxu0 %v2136
    %2154 = vmatprep.subr.mxu0 0.0
    %2155 = vmatpush1.msra.mxu0 %v2135
    %2156 = vmatprep.subr.mxu0 0.0
    %2157 = vmatpush1.msra.mxu0 %v2134
    %2158 = vmatprep.subr.mxu0 0.0
    %2159 = vmatpush1.msra.mxu0 %v2133
    %2160 = vmatprep.subr.mxu0 0.0
    %2161 = vmatpush1.msra.mxu0 %v2132
    %2162 = vmatprep.subr.mxu0 0.0
    %2163 = vmatpush1.msra.mxu0 %v2131
    %2164 = vmatprep.subr.mxu0 0.0
    %2165 = vmatpush1.msra.mxu0 %v2130
    %2166 = vmatprep.subr.mxu0 0.0
    %2167 = vmatpush1.msra.mxu0 %v2129
    %2168 = vmatprep.subr.mxu0 0.0
    %2169 = vmatpush1.msra.mxu0 %v2128
    %2170 = vmatprep.subr.mxu0 0.0
    %2171 = vmatpush1.msra.mxu0 %v2127
    %2172 = vmatprep.subr.mxu0 0.0
    %2173 = vmatpush1.msra.mxu0 %v2126
    %2174 = vmatprep.subr.mxu0 0.0
    %2175 = vmatpush2.msra.mxu0 0.0
    %2176 = vmatprep.subr.mxu0 0.0
    %2177 = vmatpush2.msra.mxu0 0.0
    %2178 = vmatprep.subr.mxu0 0.0
    %2179 = vmatpush2.msra.mxu0 0.0
    %2180 = vmatprep.subr.mxu0 0.0
    %2181 = vmatpush2.msra.mxu0 0.0
    %2182 = vmatprep.subr.mxu0 0.0
    %2183 = vmatpush2.msra.mxu0 0.0
    %2184 = vmatprep.subr.mxu0 0.0
    %2185 = vmatpush2.msra.mxu0 0.0
    %2186 = vmatprep.subr.mxu0 0.0
    %2187 = vmatpush2.msra.mxu0 0.0
    %2188 = vmatprep.subr.mxu0 0.0
    %2189 = vmatpush2.msra.mxu0 0.0
    %2190 = vmatprep.subr.mxu0 0.0
    %2191 = vmatpush2.msra.mxu0 0.0
    %2192 = vmatprep.subr.mxu0 0.0
    %2193 = vmatpush2.msra.mxu0 0.0
    %2194 = vmatprep.subr.mxu0 0.0
    %2195 = vmatpush2.msra.mxu0 0.0
    %2196 = vmatprep.subr.mxu0 0.0
    %2197 = vmatpush2.msra.mxu0 0.0
    %2198 = vmatprep.subr.mxu0 0.0
    %2199 = vmatpush2.msra.mxu0 0.0
    %2200 = vmatprep.subr.mxu0 0.0
    %2201 = vmatpush2.msra.mxu0 0.0
    %2202 = vmatprep.subr.mxu0 0.0
    %2203 = vmatpush2.msra.mxu0 0.0
    %2204 = vmatprep.subr.mxu0 0.0
    %2205 = vmatpush2.msra.mxu0 0.0
    %2206 = vmatprep.mubr.f32.mxu0 0.0
    %2207 = vmatmul.mubr.f32.gmra.mxu0 %v1698
    %v2208 = vpop.f32.mrf.mxu0
    %v2209 = vadd.f32 0.0, %v2208
    %v2210 = vpop.f32.mrf.mxu0
    %2211 = vmatprep.mubr.f32.mxu0 0.0
    %2212 = vmatmul.mubr.f32.gmra.mxu0 %v1699
    %v2213 = vpop.f32.mrf.mxu0
    %v2214 = vadd.f32 0.0, %v2213
    %v2215 = vpop.f32.mrf.mxu0
    %2216 = vmatprep.mubr.f32.mxu0 0.0
    %2217 = vmatmul.mubr.f32.gmra.mxu0 %v1700
    %v2218 = vpop.f32.mrf.mxu0
    %v2219 = vadd.f32 0.0, %v2218
    %v2220 = vpop.f32.mrf.mxu0
    %2221 = vmatprep.mubr.f32.mxu0 0.0
    %2222 = vmatmul.mubr.f32.gmra.mxu0 %v1701
    %v2223 = vpop.f32.mrf.mxu0
    %v2224 = vadd.f32 0.0, %v2223
    %v2225 = vpop.f32.mrf.mxu0
    %2226 = vmatprep.mubr.f32.mxu0 0.0
    %2227 = vmatmul.mubr.f32.gmra.mxu0 %v1702
    %v2228 = vpop.f32.mrf.mxu0
    %v2229 = vadd.f32 0.0, %v2228
    %v2230 = vpop.f32.mrf.mxu0
    %2231 = vmatprep.mubr.f32.mxu0 0.0
    %2232 = vmatmul.mubr.f32.gmra.mxu0 %v1703
    %v2233 = vpop.f32.mrf.mxu0
    %v2234 = vadd.f32 0.0, %v2233
    %v2235 = vpop.f32.mrf.mxu0
    %2236 = vmatprep.mubr.f32.mxu0 0.0
    %2237 = vmatmul.mubr.f32.gmra.mxu0 %v1704
    %v2238 = vpop.f32.mrf.mxu0
    %v2239 = vadd.f32 0.0, %v2238
    %v2240 = vpop.f32.mrf.mxu0
    %2241 = vmatprep.mubr.f32.mxu0 0.0
    %2242 = vmatmul.mubr.f32.gmra.mxu0 %v1705
    %v2243 = vpop.f32.mrf.mxu0
    %v2244 = vadd.f32 0.0, %v2243
    %v2245 = vpop.f32.mrf.mxu0
    %2246 = vdwg.mxu0
    %2247 = vmatprep.subr.mxu0 0.0
    %2248 = vmatpush1.msra.mxu0 %v2141
    %2249 = vmatprep.subr.mxu0 0.0
    %2250 = vmatpush1.msra.mxu0 %v2140
    %2251 = vmatprep.subr.mxu0 0.0
    %2252 = vmatpush1.msra.mxu0 %v2139
    %2253 = vmatprep.subr.mxu0 0.0
    %2254 = vmatpush1.msra.mxu0 %v2138
    %2255 = vmatprep.subr.mxu0 0.0
    %2256 = vmatpush1.msra.mxu0 %v2137
    %2257 = vmatprep.subr.mxu0 0.0
    %2258 = vmatpush1.msra.mxu0 %v2136
    %2259 = vmatprep.subr.mxu0 0.0
    %2260 = vmatpush1.msra.mxu0 %v2135
    %2261 = vmatprep.subr.mxu0 0.0
    %2262 = vmatpush1.msra.mxu0 %v2134
    %2263 = vmatprep.subr.mxu0 0.0
    %2264 = vmatpush1.msra.mxu0 %v2133
    %2265 = vmatprep.subr.mxu0 0.0
    %2266 = vmatpush1.msra.mxu0 %v2132
    %2267 = vmatprep.subr.mxu0 0.0
    %2268 = vmatpush1.msra.mxu0 %v2131
    %2269 = vmatprep.subr.mxu0 0.0
    %2270 = vmatpush1.msra.mxu0 %v2130
    %2271 = vmatprep.subr.mxu0 0.0
    %2272 = vmatpush1.msra.mxu0 %v2129
    %2273 = vmatprep.subr.mxu0 0.0
    %2274 = vmatpush1.msra.mxu0 %v2128
    %2275 = vmatprep.subr.mxu0 0.0
    %2276 = vmatpush1.msra.mxu0 %v2127
    %2277 = vmatprep.subr.mxu0 0.0
    %2278 = vmatpush1.msra.mxu0 %v2126
    %2279 = vmatprep.subr.mxu0 0.0
    %2280 = vmatpush2.msra.mxu0 0.0
    %2281 = vmatprep.subr.mxu0 0.0
    %2282 = vmatpush2.msra.mxu0 0.0
    %2283 = vmatprep.subr.mxu0 0.0
    %2284 = vmatpush2.msra.mxu0 0.0
    %2285 = vmatprep.subr.mxu0 0.0
    %2286 = vmatpush2.msra.mxu0 0.0
    %2287 = vmatprep.subr.mxu0 0.0
    %2288 = vmatpush2.msra.mxu0 0.0
    %2289 = vmatprep.subr.mxu0 0.0
    %2290 = vmatpush2.msra.mxu0 0.0
    %2291 = vmatprep.subr.mxu0 0.0
    %2292 = vmatpush2.msra.mxu0 0.0
    %2293 = vmatprep.subr.mxu0 0.0
    %2294 = vmatpush2.msra.mxu0 0.0
    %2295 = vmatprep.subr.mxu0 0.0
    %2296 = vmatpush2.msra.mxu0 0.0
    %2297 = vmatprep.subr.mxu0 0.0
    %2298 = vmatpush2.msra.mxu0 0.0
    %2299 = vmatprep.subr.mxu0 0.0
    %2300 = vmatpush2.msra.mxu0 0.0
    %2301 = vmatprep.subr.mxu0 0.0
    %2302 = vmatpush2.msra.mxu0 0.0
    %2303 = vmatprep.subr.mxu0 0.0
    %2304 = vmatpush2.msra.mxu0 0.0
    %2305 = vmatprep.subr.mxu0 0.0
    %2306 = vmatpush2.msra.mxu0 0.0
    %2307 = vmatprep.subr.mxu0 0.0
    %2308 = vmatpush2.msra.mxu0 0.0
    %2309 = vmatprep.subr.mxu0 0.0
    %2310 = vmatpush2.msra.mxu0 0.0
    %2311 = vmatprep.mubr.f32.mxu0 0.0
    %2312 = vmatmul.mubr.f32.gmra.mxu0 %v1706
    %v2313 = vpop.f32.mrf.mxu0
    %v2314 = vadd.f32 0.0, %v2313
    %v2315 = vpop.f32.mrf.mxu0
    %2316 = vmatprep.mubr.f32.mxu0 0.0
    %2317 = vmatmul.mubr.f32.gmra.mxu0 %v1707
    %v2318 = vpop.f32.mrf.mxu0
    %v2319 = vadd.f32 0.0, %v2318
    %v2320 = vpop.f32.mrf.mxu0
    %2321 = vmatprep.mubr.f32.mxu0 0.0
    %2322 = vmatmul.mubr.f32.gmra.mxu0 %v1708
    %v2323 = vpop.f32.mrf.mxu0
    %v2324 = vadd.f32 0.0, %v2323
    %v2325 = vpop.f32.mrf.mxu0
    %2326 = vmatprep.mubr.f32.mxu0 0.0
    %2327 = vmatmul.mubr.f32.gmra.mxu0 %v1709
    %v2328 = vpop.f32.mrf.mxu0
    %v2329 = vadd.f32 0.0, %v2328
    %v2330 = vpop.f32.mrf.mxu0
    %2331 = vmatprep.mubr.f32.mxu0 0.0
    %2332 = vmatmul.mubr.f32.gmra.mxu0 %v1710
    %v2333 = vpop.f32.mrf.mxu0
    %v2334 = vadd.f32 0.0, %v2333
    %v2335 = vpop.f32.mrf.mxu0
    %2336 = vmatprep.mubr.f32.mxu0 0.0
    %2337 = vmatmul.mubr.f32.gmra.mxu0 %v1711
    %v2338 = vpop.f32.mrf.mxu0
    %v2339 = vadd.f32 0.0, %v2338
    %v2340 = vpop.f32.mrf.mxu0
    %2341 = vmatprep.mubr.f32.mxu0 0.0
    %2342 = vmatmul.mubr.f32.gmra.mxu0 %v1712
    %v2343 = vpop.f32.mrf.mxu0
    %v2344 = vadd.f32 0.0, %v2343
    %v2345 = vpop.f32.mrf.mxu0
    %2346 = vmatprep.mubr.f32.mxu0 0.0
    %2347 = vmatmul.mubr.f32.gmra.mxu0 %v1713
    %v2348 = vpop.f32.mrf.mxu0
    %v2349 = vadd.f32 0.0, %v2348
    %v2350 = vpop.f32.mrf.mxu0
    %2351 = vdwg.mxu0
    %v2352 = vmax.f32 %v2209, %v2314
    %v2353 = vmax.f32 %v2214, %v2319
    %v2354 = vmax.f32 %v2219, %v2324
    %v2355 = vmax.f32 %v2224, %v2329
    %v2356 = vmax.f32 %v2229, %v2334
    %v2357 = vmax.f32 %v2234, %v2339
    %v2358 = vmax.f32 %v2239, %v2344
    %v2359 = vmax.f32 %v2244, %v2349
    %2361 = vset.pattern.permute.xlu0 0
    %2362 = vperm.xlu0 %2361, %v1714
    %v2363 = vpop.permute.xlu0 %2362
    %2366 = vset.pattern.permute.xlu0 0
    %2367 = vperm.xlu0 %2366, %v1715
    %v2368 = vpop.permute.xlu0 %2367
    %2371 = vset.pattern.permute.xlu0 0
    %2372 = vperm.xlu0 %2371, %v1716
    %v2373 = vpop.permute.xlu0 %2372
    %2376 = vset.pattern.permute.xlu0 0
    %2377 = vperm.xlu0 %2376, %v1717
    %v2378 = vpop.permute.xlu0 %2377
    %2381 = vset.pattern.permute.xlu0 0
    %2382 = vperm.xlu0 %2381, %v1718
    %v2383 = vpop.permute.xlu0 %2382
    %2386 = vset.pattern.permute.xlu0 0
    %2387 = vperm.xlu0 %2386, %v1719
    %v2388 = vpop.permute.xlu0 %2387
    %2391 = vset.pattern.permute.xlu0 0
    %2392 = vperm.xlu0 %2391, %v1720
    %v2393 = vpop.permute.xlu0 %2392
    %2396 = vset.pattern.permute.xlu0 0
    %2397 = vperm.xlu0 %2396, %v1721
    %v2398 = vpop.permute.xlu0 %2397
    %v2400 = vadd.f32 %v2352, %v2363
    %v2401 = vadd.f32 %v2353, %v2368
    %v2402 = vadd.f32 %v2354, %v2373
    %v2403 = vadd.f32 %v2355, %v2378
    %v2404 = vadd.f32 %v2356, %v2383
    %v2405 = vadd.f32 %v2357, %v2388
    %v2406 = vadd.f32 %v2358, %v2393
    %v2407 = vadd.f32 %v2359, %v2398
    %2409 = vset.pattern.permute.xlu0 0
    %2410 = vperm.xlu0 %2409, %v1723
    %v2411 = vpop.permute.xlu0 %2410
    %v2413 = vlaneseq
    %v2414 = vshrl.u32 %v2413, 7
    %v2415 = vsub.s32 0, %v2414
    %v2416 = vrot.slane %v2411, %v2415
    %vm2417 = vcmask 523264
    %v2419 = vsel %vm2417, %v1722, 0
    %2421 = vmatprep.subr.mxu0 0.0
    %2422 = vmatpush1.msra.mxu0 0.0
    %2423 = vmatprep.subr.mxu0 0.0
    %2424 = vmatpush1.msra.mxu0 0.0
    %2425 = vmatprep.subr.mxu0 0.0
    %2426 = vmatpush1.msra.mxu0 0.0
    %2427 = vmatprep.subr.mxu0 0.0
    %2428 = vmatpush1.msra.mxu0 0.0
    %2429 = vmatprep.subr.mxu0 0.0
    %2430 = vmatpush1.msra.mxu0 0.0
    %2431 = vmatprep.subr.mxu0 0.0
    %2432 = vmatpush1.msra.mxu0 0.0
    %2433 = vmatprep.subr.mxu0 0.0
    %2434 = vmatpush1.msra.mxu0 0.0
    %2435 = vmatprep.subr.mxu0 0.0
    %2436 = vmatpush1.msra.mxu0 0.0
    %2437 = vmatprep.subr.mxu0 0.0
    %2438 = vmatpush1.msra.mxu0 %v2407
    %2439 = vmatprep.subr.mxu0 0.0
    %2440 = vmatpush1.msra.mxu0 %v2406
    %2441 = vmatprep.subr.mxu0 0.0
    %2442 = vmatpush1.msra.mxu0 %v2405
    %2443 = vmatprep.subr.mxu0 0.0
    %2444 = vmatpush1.msra.mxu0 %v2404
    %2445 = vmatprep.subr.mxu0 0.0
    %2446 = vmatpush1.msra.mxu0 %v2403
    %2447 = vmatprep.subr.mxu0 0.0
    %2448 = vmatpush1.msra.mxu0 %v2402
    %2449 = vmatprep.subr.mxu0 0.0
    %2450 = vmatpush1.msra.mxu0 %v2401
    %2451 = vmatprep.subr.mxu0 0.0
    %2452 = vmatpush1.msra.mxu0 %v2400
    %2453 = vmatprep.subr.mxu0 0.0
    %2454 = vmatpush2.msra.mxu0 0.0
    %2455 = vmatprep.subr.mxu0 0.0
    %2456 = vmatpush2.msra.mxu0 0.0
    %2457 = vmatprep.subr.mxu0 0.0
    %2458 = vmatpush2.msra.mxu0 0.0
    %2459 = vmatprep.subr.mxu0 0.0
    %2460 = vmatpush2.msra.mxu0 0.0
    %2461 = vmatprep.subr.mxu0 0.0
    %2462 = vmatpush2.msra.mxu0 0.0
    %2463 = vmatprep.subr.mxu0 0.0
    %2464 = vmatpush2.msra.mxu0 0.0
    %2465 = vmatprep.subr.mxu0 0.0
    %2466 = vmatpush2.msra.mxu0 0.0
    %2467 = vmatprep.subr.mxu0 0.0
    %2468 = vmatpush2.msra.mxu0 0.0
    %2469 = vmatprep.subr.mxu0 0.0
    %2470 = vmatpush2.msra.mxu0 0.0
    %2471 = vmatprep.subr.mxu0 0.0
    %2472 = vmatpush2.msra.mxu0 0.0
    %2473 = vmatprep.subr.mxu0 0.0
    %2474 = vmatpush2.msra.mxu0 0.0
    %2475 = vmatprep.subr.mxu0 0.0
    %2476 = vmatpush2.msra.mxu0 0.0
    %2477 = vmatprep.subr.mxu0 0.0
    %2478 = vmatpush2.msra.mxu0 0.0
    %2479 = vmatprep.subr.mxu0 0.0
    %2480 = vmatpush2.msra.mxu0 0.0
    %2481 = vmatprep.subr.mxu0 0.0
    %2482 = vmatpush2.msra.mxu0 0.0
    %2483 = vmatprep.subr.mxu0 0.0
    %2484 = vmatpush2.msra.mxu0 0.0
    %2485 = vmatprep.mubr.f32.mxu0 0.0
    %2486 = vmatmul.mubr.f32.gmra.mxu0 %v2419
    %v2487 = vpop.f32.mrf.mxu0
    %v2488 = vadd.f32 %v2416, %v2487
    %v2489 = vpop.f32.mrf.mxu0
    %2490 = vdwg.mxu0
    %v2491 = vmul.f32 %v1631, %v2488
    %v2492 = vxor.u32 %v2491, 2147483648
    %v2493 = vmul.f32 %v2492, 1.442695
    %v2494 = vpow.pop %v2493
    %v2495 = vadd.f32 %v2494, 1.0
    %v2496 = vrcp.pop %v2495
    %v2497 = vmul.f32 1.0, %v2496
    %v2498 = vlaneseq
    %v2499 = vshrl.u32 %v2498, 7
    %v2500 = vsub.s32 0, %v2499
    %v2501 = vrot.slane %v2497, %v2500
    %2502 = vst [vmem:[#allocation18] sm:$0xff] %v2501
    // Predicated region
    $region106: #{tpu_custom_call.1} parent=1 // pred_check
      _
    $region107: #{tpu_custom_call.1} parent=1 // pred_check_branch
      %2504 = sbr.rel (0) target = $region109
    $region108: #{tpu_custom_call.1} parent=1 // pred_region
      %s2506 = ssub.s32 128, 128
      %2507 = vsyncadd [#allocation6], %s2506
      %s2509 = sshll.u32 [#allocation18], 4
      %s2510 = int_to_ptr.vmem [resolvable:$true] %s2509
      %2512 = dma.vmem_to_hbm [thread:$0]  %s2510, 128, %s18, [#allocation6]
    $region109: #{tpu_custom_call.1} parent=1 // pred_fallthru
      _
    // Predicated region
    $region110: #{tpu_custom_call.1} parent=1 // pred_check
      _
    $region111: #{tpu_custom_call.1} parent=1 // pred_check_branch
      %2514 = sbr.rel (0) target = $region113
    $region112: #{tpu_custom_call.1} parent=1 // pred_region
      %2515 = dma.done [#allocation6], 128
    $region113: #{tpu_custom_call.1} parent=1 // pred_fallthru
      _
    %2516 = vsyncpa [#allocation5], 1
    %2517 = vsyncpa [#allocation8], 1
    %2518 = vsyncpa [#allocation11], 1
    %2519 = vsyncpa [#allocation14], 1
    %2520 = vsyncpa [#allocation17], 1
    %2521 = vsyncpa [#allocation6], 1

</llo_original>
